<compile_context>
chip_gen: v7x
topology: tpu7x:2x2x1
jax: 0.10.0
libtpu: 0.0.40
codegen_flags: <defaults>
</compile_context>

<pallas_src>
import jax
import jax.numpy as jnp
from jax import lax
from jax.experimental import pallas as pl
from jax.experimental.pallas import tpu as pltpu


# ------------------------------ kernel -------------------------------------- #

def _make_gwn_adapter_kernel(*, num_blocks, kernel_size, dilations, seq_len,
                             num_nodes, hidden, horizon, out_dim,
                             use_layernorm, eps=1e-5):
    k = kernel_size
    B = num_blocks
    N, C, H, O = num_nodes, hidden, horizon, out_dim
    bf16, f32 = jnp.bfloat16, jnp.float32

    # bias-slab row layout (must stay in sync with the wrapper)
    ROW_START = 0
    ROW_FG    = 1            # B rows, width 2C   (filter|gate)
    ROW_SKIP  = 1 + B        # B rows, width C
    ROW_GCONV = 1 + 2 * B    # B rows, width C
    ROW_END1  = 1 + 3 * B    # width C
    ROW_END2  = 2 + 3 * B    # width (H+1)*C  (horizon slices + folded mean)
    ROW_GAMMA = 3 + 3 * B    # width 3C
    ROW_BETA  = 4 + 3 * B    # width 3C
    ROW_OUT   = 5 + 3 * B    # width O

    def kernel(x_ref, ablk_ref, wst_ref, wfg_ref, wsk_ref, wc_ref,
               we1_ref, we2_ref, wo_ref, bias_ref, o_ref):
        bias = bias_ref[...]                            # (3B+6, max_w) f32

        def brow(r, w):                                 # (1, w) bias row
            return bias[r:r + 1, :w]

        # ---- start 1x1 conv on the time-stacked activations -----------------
        # (the PyTorch permute(1,0,2).unsqueeze(0) is pure layout; absorbed by
        #  the (T*N, C) row stacking done in the wrapper.)
        cur = jnp.dot(x_ref[...], wst_ref[...],
                      preferred_element_type=f32) + brow(ROW_START, C)
        t_cur = seq_len                                  # time steps alive
        skip = jnp.zeros((N, C), f32)

        # ---- spatio-temporal blocks -----------------------------------------
        for b in range(B):
            d = dilations[b]
            t_out = t_cur - (k - 1) * d
            rows = t_out * N
            cur_bf = cur.astype(bf16)

            # gated dilated causal TCN: all kept time steps stacked on the
            # sublane axis; filter & gate fused on the lane axis; taps
            # accumulated into a single f32 array.
            fg = jnp.dot(cur_bf[0:rows, :], wfg_ref[b, 0],
                         preferred_element_type=f32)
            for j in range(1, k):
                off = j * d * N
                fg = fg + jnp.dot(cur_bf[off:off + rows, :], wfg_ref[b, j],
                                  preferred_element_type=f32)
            fg = fg + brow(ROW_FG + b, 2 * C)            # (rows, 2C)
            filt = jnp.tanh(fg[:, :C])                            # EUP
            gate = 0.5 * (jnp.tanh(0.5 * fg[:, C:]) + 1.0)        # sigmoid/EUP
            h = filt * gate                              # (rows, C) f32

            # skip connection: only the newest time step feeds the head
            h_last = h[(t_out - 1) * N:rows, :].astype(bf16)
            skip = skip + jnp.dot(h_last, wsk_ref[b],
                                  preferred_element_type=f32) \
                        + brow(ROW_SKIP + b, C)

            if b < B - 1:
                # graph diffusion batched over all kept time steps with the
                # block-diagonal (I_t (x) A); channel mix commutes with A,
                # dropout is identity at inference and is elided.
                hm = jnp.dot(h.astype(bf16), wc_ref[b],
                             preferred_element_type=f32)
                z = jnp.dot(ablk_ref[:rows, :rows], hm.astype(bf16),
                            preferred_element_type=f32) \
                    + brow(ROW_GCONV + b, C)
                roff = (k - 1) * d * N
                cur = z + cur[roff:roff + rows, :]       # residual
                t_cur = t_out
            # else: last block's residual output never reaches the head.

        # ---- end MLP: all horizon slices + folded mean in ONE wide dot -------
        s = jnp.maximum(skip, 0.0)
        e1 = jnp.maximum(jnp.dot(s.astype(bf16), we1_ref[...],
                                 preferred_element_type=f32)
                         + brow(ROW_END1, C), 0.0)
        y = jnp.dot(e1.astype(bf16), we2_ref[...],
                    preferred_element_type=f32) + brow(ROW_END2, (H + 1) * C)

        # ---- adapter head: last / mean / max over the horizon ---------------
        last = y[:, (H - 1) * C:H * C]
        mean_p = y[:, H * C:(H + 1) * C]     # folded mean weights -> free
        mx = y[:, 0:C]
        for hh in range(1, H):
            mx = jnp.maximum(mx, y[:, hh * C:(hh + 1) * C])
        pieces = (last, mean_p, mx)          # virtual concat, width 3*C

        # LayerNorm(3*C) decomposed over the three pieces (no in-kernel concat)
        if use_layernorm:
            ssum = None
            for p in pieces:
                rs = jnp.sum(p, axis=-1, keepdims=True)
                ssum = rs if ssum is None else ssum + rs
            mu = ssum * (1.0 / (3 * C))
            sq = None
            for p in pieces:
                dlt = p - mu
                rs = jnp.sum(dlt * dlt, axis=-1, keepdims=True)
                sq = rs if sq is None else sq + rs
            inv = lax.rsqrt(sq * (1.0 / (3 * C)) + eps)            # EUP
            gam = brow(ROW_GAMMA, 3 * C)
            bet = brow(ROW_BETA, 3 * C)
            pieces = tuple((p - mu) * inv * gam[:, i * C:(i + 1) * C]
                           + bet[:, i * C:(i + 1) * C]
                           for i, p in enumerate(pieces))

        # output linear (3*C -> O), weight chunked to match the virtual concat
        out = jnp.dot(pieces[0].astype(bf16), wo_ref[0],
                      preferred_element_type=f32)
        for i in range(1, 3):
            out = out + jnp.dot(pieces[i].astype(bf16), wo_ref[i],
                                preferred_element_type=f32)
        out = out + brow(ROW_OUT, O)
        o_ref[...] = out.astype(o_ref.dtype)

    return kernel


# ------------------------------ wrapper ------------------------------------- #

def _zero_index_map(ndim):
    def imap(i):
        return (0,) * ndim
    return imap


def gwn_v2_adapter(x, transition, params, *, num_blocks, kernel_size,
                   output_dim, normalization_name="LayerNorm"):
    """Inference forward of GWNv2Adapter as one fused Pallas TPU kernel.

    x:          (seq_len, num_nodes, hidden)  float32
    transition: (num_nodes, num_nodes)        row-normalized transition matrix
    params:     weights stored matmul-ready in (in, out) layout.
    """
    T, N, C = x.shape
    B, k = num_blocks, kernel_size
    H = O = output_dim                          # GWN horizon == adapter output_dim
    dilations = [2 ** b for b in range(B)]
    assert T - (k - 1) * sum(dilations) >= 1, "seq too short"
    assert normalization_name in ("none", "LayerNorm"), \
        "BatchNorm not implemented"             # TODO(synk): BatchNorm eval mode

    bf16, f32 = jnp.bfloat16, jnp.float32

    # activations: time stacked into the sublane axis, pre-cast to bf16
    x_stk = x.reshape(T * N, C).astype(bf16)

    # block-diagonal (I_t (x) A) transition for time-batched diffusion
    t_diff = max(T - (k - 1) * dilations[0], 1)
    a_blk = jnp.kron(jnp.eye(t_diff, dtype=f32),
                     transition.astype(f32)).astype(bf16)

    # fused per-tap filter|gate weights / biases  (B, k, C, 2C) / (B, 1, 2C)
    w_fg = jnp.concatenate([params["w_filter"], params["w_gate"]],
                           axis=-1).astype(bf16)
    b_fg = jnp.concatenate([params["b_filter"], params["b_gate"]], axis=-1)

    # end-MLP second layer packed over the horizon + folded mean column block
    we2, be2 = params["w_end2"], params["b_end2"]          # (H,C,C) / (H,1,C)
    we2p = jnp.concatenate(list(we2) + [jnp.mean(we2, axis=0)],
                           axis=-1).astype(bf16)            # (C, (H+1)*C)
    be2p = jnp.concatenate(list(be2) + [jnp.mean(be2, axis=0)], axis=-1)

    gam = jnp.concatenate(list(params.get("ln_gamma",
                                          jnp.ones((3, 1, C), f32))), axis=-1)
    bet = jnp.concatenate(list(params.get("ln_beta",
                                          jnp.zeros((3, 1, C), f32))), axis=-1)

    # all f32 bias / affine vectors packed into one slab (fewer tiny DMAs)
    max_w = max(C, 2 * C, (H + 1) * C, 3 * C, O)

    def row(v):
        v = v.reshape(1, -1).astype(f32)
        return jnp.pad(v, ((0, 0), (0, max_w - v.shape[-1])))

    slab = [row(params["b_start"])]
    slab += [row(b_fg[b]) for b in range(B)]
    slab += [row(params["b_skip"][b]) for b in range(B)]
    slab += [row(params["b_gconv"][b]) for b in range(B)]
    slab += [row(params["b_end1"]), row(be2p), row(gam), row(bet),
             row(params["b_out"])]
    bias_slab = jnp.concatenate(slab, axis=0)               # (3B+6, max_w)

    kernel = _make_gwn_adapter_kernel(
        num_blocks=B, kernel_size=k, dilations=dilations, seq_len=T,
        num_nodes=N, hidden=C, horizon=H, out_dim=O,
        use_layernorm=(normalization_name == "LayerNorm"))

    inputs = [
        x_stk, a_blk,
        params["w_start"].astype(bf16), w_fg,
        params["w_skip"].astype(bf16), params["w_gconv"].astype(bf16),
        params["w_end1"].astype(bf16), we2p,
        params["w_out"].astype(bf16), bias_slab,
    ]

    out = pl.pallas_call(
        kernel,
        out_shape=jax.ShapeDtypeStruct((N, O), jnp.float32),
        grid=(1,),
        in_specs=[pl.BlockSpec(a.shape, _zero_index_map(a.ndim)) for a in inputs],
        out_specs=pl.BlockSpec((N, O), _zero_index_map(2)),
        compiler_params=pltpu.CompilerParams(
            dimension_semantics=("arbitrary",)),
    )(*inputs)

    return out[:, 0] if O == 1 else out          # torch .squeeze(1)


# ------------------------------ demo ----------------------------------------- #

if __name__ == "__main__":
    seq_length, num_nodes, hidden_dim = 8, 8, 32
    num_blocks, kernel_size, output_dim = 2, 2, 4

    key = jax.random.PRNGKey(0)
    keys = jax.random.split(key, 20)

    x = jax.random.normal(keys[0], (seq_length, num_nodes, hidden_dim),
                          dtype=jnp.float32)

    # to_dense_adj + calculate_transition_matrix stand-in:
    # random directed graph + self loops, row-normalized.
    adj = (jax.random.uniform(keys[1], (num_nodes, num_nodes)) < 0.4)
    adj = adj.astype(jnp.float32) + jnp.eye(num_nodes, dtype=jnp.float32)
    transition = adj / jnp.sum(adj, axis=-1, keepdims=True)

    C, B, k, H, O = hidden_dim, num_blocks, kernel_size, output_dim, output_dim

    def w(kk, shape):
        return 0.1 * jax.random.normal(kk, shape, dtype=jnp.float32)

    params = {
        "w_start":  w(keys[2], (C, C)),        "b_start":  w(keys[3], (1, C)),
        "w_filter": w(keys[4], (B, k, C, C)),  "b_filter": w(keys[5], (B, 1, C)),
        "w_gate":   w(keys[6], (B, k, C, C)),  "b_gate":   w(keys[7], (B, 1, C)),
        "w_skip":   w(keys[8], (B, C, C)),     "b_skip":   w(keys[9], (B, 1, C)),
        "w_gconv":  w(keys[10], (B, C, C)),    "b_gconv":  w(keys[11], (B, 1, C)),
        "w_end1":   w(keys[12], (C, C)),       "b_end1":   w(keys[13], (1, C)),
        "w_end2":   w(keys[14], (H, C, C)),    "b_end2":   w(keys[15], (H, 1, C)),
        "ln_gamma": jnp.ones((3, 1, C), jnp.float32),
        "ln_beta":  jnp.zeros((3, 1, C), jnp.float32),
        "w_out":    w(keys[16], (3, C, O)),    "b_out":    w(keys[17], (1, O)),
    }

    y = gwn_v2_adapter(x, transition, params,
                       num_blocks=num_blocks, kernel_size=kernel_size,
                       output_dim=output_dim, normalization_name="LayerNorm")
    jax.block_until_ready(y)
    assert y.shape == (num_nodes, output_dim) and y.dtype == jnp.float32
    assert bool(jnp.all(jnp.isfinite(y)))
    print("KERNEL_OK")
</pallas_src>

<mosaic_0001>
module attributes {stable_mosaic.version = 11 : i64} {
  func.func @kernel(%arg0: i32, %arg1: memref<64x32xbf16, #tpu.memory_space<vmem>>, %arg2: memref<56x56xbf16, #tpu.memory_space<vmem>>, %arg3: memref<32x32xbf16, #tpu.memory_space<vmem>>, %arg4: memref<2x2x32x64xbf16, #tpu.memory_space<vmem>>, %arg5: memref<2x32x32xbf16, #tpu.memory_space<vmem>>, %arg6: memref<2x32x32xbf16, #tpu.memory_space<vmem>>, %arg7: memref<32x32xbf16, #tpu.memory_space<vmem>>, %arg8: memref<32x160xbf16, #tpu.memory_space<vmem>>, %arg9: memref<3x32x4xbf16, #tpu.memory_space<vmem>>, %arg10: memref<12x160xf32, #tpu.memory_space<vmem>>, %arg11: memref<8x4xf32, #tpu.memory_space<vmem>>) attributes {dimension_semantics = [#tpu.dimension_semantics<arbitrary>], iteration_bounds = array<i64: 1>, scalar_prefetch = 0 : i64, scratch_operands = 0 : i64, tpu.core_type = #tpu.core_type<tc>, window_params = [{pipeline_mode = #tpu.pipeline_mode<synchronous>, transform_indices = @transform_0, window_bounds = array<i64: 64, 32>}, {pipeline_mode = #tpu.pipeline_mode<synchronous>, transform_indices = @transform_1, window_bounds = array<i64: 56, 56>}, {pipeline_mode = #tpu.pipeline_mode<synchronous>, transform_indices = @transform_2, window_bounds = array<i64: 32, 32>}, {pipeline_mode = #tpu.pipeline_mode<synchronous>, transform_indices = @transform_3, window_bounds = array<i64: 2, 2, 32, 64>}, {pipeline_mode = #tpu.pipeline_mode<synchronous>, transform_indices = @transform_4, window_bounds = array<i64: 2, 32, 32>}, {pipeline_mode = #tpu.pipeline_mode<synchronous>, transform_indices = @transform_5, window_bounds = array<i64: 2, 32, 32>}, {pipeline_mode = #tpu.pipeline_mode<synchronous>, transform_indices = @transform_6, window_bounds = array<i64: 32, 32>}, {pipeline_mode = #tpu.pipeline_mode<synchronous>, transform_indices = @transform_7, window_bounds = array<i64: 32, 160>}, {pipeline_mode = #tpu.pipeline_mode<synchronous>, transform_indices = @transform_8, window_bounds = array<i64: 3, 32, 4>}, {pipeline_mode = #tpu.pipeline_mode<synchronous>, transform_indices = @transform_9, window_bounds = array<i64: 12, 160>}, {pipeline_mode = #tpu.pipeline_mode<synchronous>, transform_indices = @transform_10, window_bounds = array<i64: 8, 4>}]} {
    %c0 = arith.constant 0 : index
    %c0_0 = arith.constant 0 : index
    %0 = vector.load %arg10[%c0, %c0_0] : memref<12x160xf32, #tpu.memory_space<vmem>>, vector<12x160xf32>
    %c0_1 = arith.constant 0 : index
    %c0_2 = arith.constant 0 : index
    %1 = vector.load %arg1[%c0_1, %c0_2] : memref<64x32xbf16, #tpu.memory_space<vmem>>, vector<64x32xbf16>
    %c0_3 = arith.constant 0 : index
    %c0_4 = arith.constant 0 : index
    %2 = vector.load %arg3[%c0_3, %c0_4] : memref<32x32xbf16, #tpu.memory_space<vmem>>, vector<32x32xbf16>
    %cst = arith.constant dense<0.000000e+00> : vector<64x32xf32>
    %3 = tpu.matmul %1, %2, %cst {dimension_numbers = #tpu.dot_dimension_numbers<[1], [0], [0], [1], [0, 0, 1, 1], [], []>} : vector<64x32xbf16>, vector<32x32xbf16>, vector<64x32xf32> -> vector<64x32xf32>
    %4 = vector.extract_strided_slice %0 {offsets = [0, 0], sizes = [1, 32], strides = [1, 1]} : vector<12x160xf32> to vector<1x32xf32>
    %5 = vector.broadcast %4 : vector<1x32xf32> to vector<64x32xf32>
    %6 = arith.addf %3, %5 : vector<64x32xf32>
    %cst_5 = arith.constant 0.000000e+00 : f32
    %7 = vector.broadcast %cst_5 : f32 to vector<8x32xf32>
    %8 = arith.truncf %6 : vector<64x32xf32> to vector<64x32xbf16>
    %9 = vector.extract_strided_slice %8 {offsets = [0, 0], sizes = [56, 32], strides = [1, 1]} : vector<64x32xbf16> to vector<56x32xbf16>
    %c0_6 = arith.constant 0 : index
    %c0_7 = arith.constant 0 : index
    %c0_8 = arith.constant 0 : index
    %c0_9 = arith.constant 0 : index
    %10 = vector.load %arg4[%c0_6, %c0_7, %c0_8, %c0_9] : memref<2x2x32x64xbf16, #tpu.memory_space<vmem>>, vector<1x1x32x64xbf16>
    %11 = vector.shape_cast %10 : vector<1x1x32x64xbf16> to vector<32x64xbf16>
    %cst_10 = arith.constant dense<0.000000e+00> : vector<56x64xf32>
    %12 = tpu.matmul %9, %11, %cst_10 {dimension_numbers = #tpu.dot_dimension_numbers<[1], [0], [0], [1], [0, 0, 1, 1], [], []>} : vector<56x32xbf16>, vector<32x64xbf16>, vector<56x64xf32> -> vector<56x64xf32>
    %13 = vector.extract_strided_slice %8 {offsets = [8, 0], sizes = [56, 32], strides = [1, 1]} : vector<64x32xbf16> to vector<56x32xbf16>
    %c0_11 = arith.constant 0 : index
    %c1 = arith.constant 1 : index
    %c0_12 = arith.constant 0 : index
    %c0_13 = arith.constant 0 : index
    %14 = vector.load %arg4[%c0_11, %c1, %c0_12, %c0_13] : memref<2x2x32x64xbf16, #tpu.memory_space<vmem>>, vector<1x1x32x64xbf16>
    %15 = vector.shape_cast %14 : vector<1x1x32x64xbf16> to vector<32x64xbf16>
    %cst_14 = arith.constant dense<0.000000e+00> : vector<56x64xf32>
    %16 = tpu.matmul %13, %15, %cst_14 {dimension_numbers = #tpu.dot_dimension_numbers<[1], [0], [0], [1], [0, 0, 1, 1], [], []>} : vector<56x32xbf16>, vector<32x64xbf16>, vector<56x64xf32> -> vector<56x64xf32>
    %17 = arith.addf %12, %16 : vector<56x64xf32>
    %18 = vector.extract_strided_slice %0 {offsets = [1, 0], sizes = [1, 64], strides = [1, 1]} : vector<12x160xf32> to vector<1x64xf32>
    %19 = vector.broadcast %18 : vector<1x64xf32> to vector<56x64xf32>
    %20 = arith.addf %17, %19 : vector<56x64xf32>
    %21 = vector.extract_strided_slice %20 {offsets = [0, 0], sizes = [56, 32], strides = [1, 1]} : vector<56x64xf32> to vector<56x32xf32>
    %22 = math.tanh %21 : vector<56x32xf32>
    %23 = vector.extract_strided_slice %20 {offsets = [0, 32], sizes = [56, 32], strides = [1, 1]} : vector<56x64xf32> to vector<56x32xf32>
    %cst_15 = arith.constant 5.000000e-01 : f32
    %24 = vector.broadcast %cst_15 : f32 to vector<56x32xf32>
    %25 = arith.mulf %24, %23 : vector<56x32xf32>
    %26 = math.tanh %25 : vector<56x32xf32>
    %cst_16 = arith.constant 1.000000e+00 : f32
    %27 = vector.broadcast %cst_16 : f32 to vector<56x32xf32>
    %28 = arith.addf %26, %27 : vector<56x32xf32>
    %cst_17 = arith.constant 5.000000e-01 : f32
    %29 = vector.broadcast %cst_17 : f32 to vector<56x32xf32>
    %30 = arith.mulf %29, %28 : vector<56x32xf32>
    %31 = arith.mulf %22, %30 : vector<56x32xf32>
    %32 = vector.extract_strided_slice %31 {offsets = [48, 0], sizes = [8, 32], strides = [1, 1]} : vector<56x32xf32> to vector<8x32xf32>
    %33 = arith.truncf %32 : vector<8x32xf32> to vector<8x32xbf16>
    %c0_18 = arith.constant 0 : index
    %c0_19 = arith.constant 0 : index
    %c0_20 = arith.constant 0 : index
    %34 = vector.load %arg5[%c0_18, %c0_19, %c0_20] : memref<2x32x32xbf16, #tpu.memory_space<vmem>>, vector<1x32x32xbf16>
    %35 = vector.shape_cast %34 : vector<1x32x32xbf16> to vector<32x32xbf16>
    %cst_21 = arith.constant dense<0.000000e+00> : vector<8x32xf32>
    %36 = tpu.matmul %33, %35, %cst_21 {dimension_numbers = #tpu.dot_dimension_numbers<[1], [0], [0], [1], [0, 0, 1, 1], [], []>} : vector<8x32xbf16>, vector<32x32xbf16>, vector<8x32xf32> -> vector<8x32xf32>
    %37 = arith.addf %7, %36 : vector<8x32xf32>
    %38 = vector.extract_strided_slice %0 {offsets = [3, 0], sizes = [1, 32], strides = [1, 1]} : vector<12x160xf32> to vector<1x32xf32>
    %39 = vector.broadcast %38 : vector<1x32xf32> to vector<8x32xf32>
    %40 = arith.addf %37, %39 : vector<8x32xf32>
    %41 = arith.truncf %31 : vector<56x32xf32> to vector<56x32xbf16>
    %c0_22 = arith.constant 0 : index
    %c0_23 = arith.constant 0 : index
    %c0_24 = arith.constant 0 : index
    %42 = vector.load %arg6[%c0_22, %c0_23, %c0_24] : memref<2x32x32xbf16, #tpu.memory_space<vmem>>, vector<1x32x32xbf16>
    %43 = vector.shape_cast %42 : vector<1x32x32xbf16> to vector<32x32xbf16>
    %cst_25 = arith.constant dense<0.000000e+00> : vector<56x32xf32>
    %44 = tpu.matmul %41, %43, %cst_25 {dimension_numbers = #tpu.dot_dimension_numbers<[1], [0], [0], [1], [0, 0, 1, 1], [], []>} : vector<56x32xbf16>, vector<32x32xbf16>, vector<56x32xf32> -> vector<56x32xf32>
    %c0_26 = arith.constant 0 : index
    %c0_27 = arith.constant 0 : index
    %45 = vector.load %arg2[%c0_26, %c0_27] : memref<56x56xbf16, #tpu.memory_space<vmem>>, vector<56x56xbf16>
    %46 = arith.truncf %44 : vector<56x32xf32> to vector<56x32xbf16>
    %cst_28 = arith.constant dense<0.000000e+00> : vector<56x32xf32>
    %47 = tpu.matmul %45, %46, %cst_28 {dimension_numbers = #tpu.dot_dimension_numbers<[1], [0], [0], [1], [0, 0, 1, 1], [], []>} : vector<56x56xbf16>, vector<56x32xbf16>, vector<56x32xf32> -> vector<56x32xf32>
    %48 = vector.extract_strided_slice %0 {offsets = [5, 0], sizes = [1, 32], strides = [1, 1]} : vector<12x160xf32> to vector<1x32xf32>
    %49 = vector.broadcast %48 : vector<1x32xf32> to vector<56x32xf32>
    %50 = arith.addf %47, %49 : vector<56x32xf32>
    %51 = vector.extract_strided_slice %6 {offsets = [8, 0], sizes = [56, 32], strides = [1, 1]} : vector<64x32xf32> to vector<56x32xf32>
    %52 = arith.addf %50, %51 : vector<56x32xf32>
    %53 = arith.truncf %52 : vector<56x32xf32> to vector<56x32xbf16>
    %54 = vector.extract_strided_slice %53 {offsets = [0, 0], sizes = [40, 32], strides = [1, 1]} : vector<56x32xbf16> to vector<40x32xbf16>
    %c1_29 = arith.constant 1 : index
    %c0_30 = arith.constant 0 : index
    %c0_31 = arith.constant 0 : index
    %c0_32 = arith.constant 0 : index
    %55 = vector.load %arg4[%c1_29, %c0_30, %c0_31, %c0_32] : memref<2x2x32x64xbf16, #tpu.memory_space<vmem>>, vector<1x1x32x64xbf16>
    %56 = vector.shape_cast %55 : vector<1x1x32x64xbf16> to vector<32x64xbf16>
    %cst_33 = arith.constant dense<0.000000e+00> : vector<40x64xf32>
    %57 = tpu.matmul %54, %56, %cst_33 {dimension_numbers = #tpu.dot_dimension_numbers<[1], [0], [0], [1], [0, 0, 1, 1], [], []>} : vector<40x32xbf16>, vector<32x64xbf16>, vector<40x64xf32> -> vector<40x64xf32>
    %58 = vector.extract_strided_slice %53 {offsets = [16, 0], sizes = [40, 32], strides = [1, 1]} : vector<56x32xbf16> to vector<40x32xbf16>
    %c1_34 = arith.constant 1 : index
    %c1_35 = arith.constant 1 : index
    %c0_36 = arith.constant 0 : index
    %c0_37 = arith.constant 0 : index
    %59 = vector.load %arg4[%c1_34, %c1_35, %c0_36, %c0_37] : memref<2x2x32x64xbf16, #tpu.memory_space<vmem>>, vector<1x1x32x64xbf16>
    %60 = vector.shape_cast %59 : vector<1x1x32x64xbf16> to vector<32x64xbf16>
    %cst_38 = arith.constant dense<0.000000e+00> : vector<40x64xf32>
    %61 = tpu.matmul %58, %60, %cst_38 {dimension_numbers = #tpu.dot_dimension_numbers<[1], [0], [0], [1], [0, 0, 1, 1], [], []>} : vector<40x32xbf16>, vector<32x64xbf16>, vector<40x64xf32> -> vector<40x64xf32>
    %62 = arith.addf %57, %61 : vector<40x64xf32>
    %63 = vector.extract_strided_slice %0 {offsets = [2, 0], sizes = [1, 64], strides = [1, 1]} : vector<12x160xf32> to vector<1x64xf32>
    %64 = vector.broadcast %63 : vector<1x64xf32> to vector<40x64xf32>
    %65 = arith.addf %62, %64 : vector<40x64xf32>
    %66 = vector.extract_strided_slice %65 {offsets = [0, 0], sizes = [40, 32], strides = [1, 1]} : vector<40x64xf32> to vector<40x32xf32>
    %67 = math.tanh %66 : vector<40x32xf32>
    %68 = vector.extract_strided_slice %65 {offsets = [0, 32], sizes = [40, 32], strides = [1, 1]} : vector<40x64xf32> to vector<40x32xf32>
    %cst_39 = arith.constant 5.000000e-01 : f32
    %69 = vector.broadcast %cst_39 : f32 to vector<40x32xf32>
    %70 = arith.mulf %69, %68 : vector<40x32xf32>
    %71 = math.tanh %70 : vector<40x32xf32>
    %cst_40 = arith.constant 1.000000e+00 : f32
    %72 = vector.broadcast %cst_40 : f32 to vector<40x32xf32>
    %73 = arith.addf %71, %72 : vector<40x32xf32>
    %cst_41 = arith.constant 5.000000e-01 : f32
    %74 = vector.broadcast %cst_41 : f32 to vector<40x32xf32>
    %75 = arith.mulf %74, %73 : vector<40x32xf32>
    %76 = arith.mulf %67, %75 : vector<40x32xf32>
    %77 = vector.extract_strided_slice %76 {offsets = [32, 0], sizes = [8, 32], strides = [1, 1]} : vector<40x32xf32> to vector<8x32xf32>
    %78 = arith.truncf %77 : vector<8x32xf32> to vector<8x32xbf16>
    %c1_42 = arith.constant 1 : index
    %c0_43 = arith.constant 0 : index
    %c0_44 = arith.constant 0 : index
    %79 = vector.load %arg5[%c1_42, %c0_43, %c0_44] : memref<2x32x32xbf16, #tpu.memory_space<vmem>>, vector<1x32x32xbf16>
    %80 = vector.shape_cast %79 : vector<1x32x32xbf16> to vector<32x32xbf16>
    %cst_45 = arith.constant dense<0.000000e+00> : vector<8x32xf32>
    %81 = tpu.matmul %78, %80, %cst_45 {dimension_numbers = #tpu.dot_dimension_numbers<[1], [0], [0], [1], [0, 0, 1, 1], [], []>} : vector<8x32xbf16>, vector<32x32xbf16>, vector<8x32xf32> -> vector<8x32xf32>
    %82 = arith.addf %40, %81 : vector<8x32xf32>
    %83 = vector.extract_strided_slice %0 {offsets = [4, 0], sizes = [1, 32], strides = [1, 1]} : vector<12x160xf32> to vector<1x32xf32>
    %84 = vector.broadcast %83 : vector<1x32xf32> to vector<8x32xf32>
    %85 = arith.addf %82, %84 : vector<8x32xf32>
    %cst_46 = arith.constant 0.000000e+00 : f32
    %86 = vector.broadcast %cst_46 : f32 to vector<8x32xf32>
    %87 = arith.maximumf %85, %86 : vector<8x32xf32>
    %88 = arith.truncf %87 : vector<8x32xf32> to vector<8x32xbf16>
    %c0_47 = arith.constant 0 : index
    %c0_48 = arith.constant 0 : index
    %89 = vector.load %arg7[%c0_47, %c0_48] : memref<32x32xbf16, #tpu.memory_space<vmem>>, vector<32x32xbf16>
    %cst_49 = arith.constant dense<0.000000e+00> : vector<8x32xf32>
    %90 = tpu.matmul %88, %89, %cst_49 {dimension_numbers = #tpu.dot_dimension_numbers<[1], [0], [0], [1], [0, 0, 1, 1], [], []>} : vector<8x32xbf16>, vector<32x32xbf16>, vector<8x32xf32> -> vector<8x32xf32>
    %91 = vector.extract_strided_slice %0 {offsets = [7, 0], sizes = [1, 32], strides = [1, 1]} : vector<12x160xf32> to vector<1x32xf32>
    %92 = vector.broadcast %91 : vector<1x32xf32> to vector<8x32xf32>
    %93 = arith.addf %90, %92 : vector<8x32xf32>
    %cst_50 = arith.constant 0.000000e+00 : f32
    %94 = vector.broadcast %cst_50 : f32 to vector<8x32xf32>
    %95 = arith.maximumf %93, %94 : vector<8x32xf32>
    %96 = arith.truncf %95 : vector<8x32xf32> to vector<8x32xbf16>
    %c0_51 = arith.constant 0 : index
    %c0_52 = arith.constant 0 : index
    %97 = vector.load %arg8[%c0_51, %c0_52] : memref<32x160xbf16, #tpu.memory_space<vmem>>, vector<32x160xbf16>
    %cst_53 = arith.constant dense<0.000000e+00> : vector<8x160xf32>
    %98 = tpu.matmul %96, %97, %cst_53 {dimension_numbers = #tpu.dot_dimension_numbers<[1], [0], [0], [1], [0, 0, 1, 1], [], []>} : vector<8x32xbf16>, vector<32x160xbf16>, vector<8x160xf32> -> vector<8x160xf32>
    %99 = vector.extract_strided_slice %0 {offsets = [8, 0], sizes = [1, 160], strides = [1, 1]} : vector<12x160xf32> to vector<1x160xf32>
    %100 = vector.broadcast %99 : vector<1x160xf32> to vector<8x160xf32>
    %101 = arith.addf %98, %100 : vector<8x160xf32>
    %102 = vector.extract_strided_slice %101 {offsets = [0, 96], sizes = [8, 32], strides = [1, 1]} : vector<8x160xf32> to vector<8x32xf32>
    %103 = vector.extract_strided_slice %101 {offsets = [0, 128], sizes = [8, 32], strides = [1, 1]} : vector<8x160xf32> to vector<8x32xf32>
    %104 = vector.extract_strided_slice %101 {offsets = [0, 0], sizes = [8, 32], strides = [1, 1]} : vector<8x160xf32> to vector<8x32xf32>
    %105 = vector.extract_strided_slice %101 {offsets = [0, 32], sizes = [8, 32], strides = [1, 1]} : vector<8x160xf32> to vector<8x32xf32>
    %106 = arith.maximumf %104, %105 : vector<8x32xf32>
    %107 = vector.extract_strided_slice %101 {offsets = [0, 64], sizes = [8, 32], strides = [1, 1]} : vector<8x160xf32> to vector<8x32xf32>
    %108 = arith.maximumf %106, %107 : vector<8x32xf32>
    %109 = vector.extract_strided_slice %101 {offsets = [0, 96], sizes = [8, 32], strides = [1, 1]} : vector<8x160xf32> to vector<8x32xf32>
    %110 = arith.maximumf %108, %109 : vector<8x32xf32>
    %cst_54 = arith.constant dense<0.000000e+00> : vector<8xf32>
    %111 = vector.multi_reduction <add>, %102, %cst_54 [1] : vector<8x32xf32> to vector<8xf32>
    %112 = vector.shape_cast %111 : vector<8xf32> to vector<8x1xf32>
    %cst_55 = arith.constant dense<0.000000e+00> : vector<8xf32>
    %113 = vector.multi_reduction <add>, %103, %cst_55 [1] : vector<8x32xf32> to vector<8xf32>
    %114 = vector.shape_cast %113 : vector<8xf32> to vector<8x1xf32>
    %115 = arith.addf %112, %114 : vector<8x1xf32>
    %cst_56 = arith.constant dense<0.000000e+00> : vector<8xf32>
    %116 = vector.multi_reduction <add>, %110, %cst_56 [1] : vector<8x32xf32> to vector<8xf32>
    %117 = vector.shape_cast %116 : vector<8xf32> to vector<8x1xf32>
    %118 = arith.addf %115, %117 : vector<8x1xf32>
    %cst_57 = arith.constant 0.010416667 : f32
    %119 = vector.broadcast %cst_57 : f32 to vector<8x1xf32>
    %120 = arith.mulf %118, %119 : vector<8x1xf32>
    %121 = vector.broadcast %120 : vector<8x1xf32> to vector<8x32xf32>
    %122 = arith.subf %102, %121 : vector<8x32xf32>
    %123 = arith.mulf %122, %122 : vector<8x32xf32>
    %cst_58 = arith.constant dense<0.000000e+00> : vector<8xf32>
    %124 = vector.multi_reduction <add>, %123, %cst_58 [1] : vector<8x32xf32> to vector<8xf32>
    %125 = vector.shape_cast %124 : vector<8xf32> to vector<8x1xf32>
    %126 = vector.broadcast %120 : vector<8x1xf32> to vector<8x32xf32>
    %127 = arith.subf %103, %126 : vector<8x32xf32>
    %128 = arith.mulf %127, %127 : vector<8x32xf32>
    %cst_59 = arith.constant dense<0.000000e+00> : vector<8xf32>
    %129 = vector.multi_reduction <add>, %128, %cst_59 [1] : vector<8x32xf32> to vector<8xf32>
    %130 = vector.shape_cast %129 : vector<8xf32> to vector<8x1xf32>
    %131 = arith.addf %125, %130 : vector<8x1xf32>
    %132 = vector.broadcast %120 : vector<8x1xf32> to vector<8x32xf32>
    %133 = arith.subf %110, %132 : vector<8x32xf32>
    %134 = arith.mulf %133, %133 : vector<8x32xf32>
    %cst_60 = arith.constant dense<0.000000e+00> : vector<8xf32>
    %135 = vector.multi_reduction <add>, %134, %cst_60 [1] : vector<8x32xf32> to vector<8xf32>
    %136 = vector.shape_cast %135 : vector<8xf32> to vector<8x1xf32>
    %137 = arith.addf %131, %136 : vector<8x1xf32>
    %cst_61 = arith.constant 0.010416667 : f32
    %138 = vector.broadcast %cst_61 : f32 to vector<8x1xf32>
    %139 = arith.mulf %137, %138 : vector<8x1xf32>
    %cst_62 = arith.constant 9.99999974E-6 : f32
    %140 = vector.broadcast %cst_62 : f32 to vector<8x1xf32>
    %141 = arith.addf %139, %140 : vector<8x1xf32>
    %142 = math.rsqrt %141 : vector<8x1xf32>
    %143 = vector.extract_strided_slice %0 {offsets = [9, 0], sizes = [1, 96], strides = [1, 1]} : vector<12x160xf32> to vector<1x96xf32>
    %144 = vector.extract_strided_slice %0 {offsets = [10, 0], sizes = [1, 96], strides = [1, 1]} : vector<12x160xf32> to vector<1x96xf32>
    %145 = vector.broadcast %120 : vector<8x1xf32> to vector<8x32xf32>
    %146 = arith.subf %102, %145 : vector<8x32xf32>
    %147 = vector.broadcast %142 : vector<8x1xf32> to vector<8x32xf32>
    %148 = arith.mulf %146, %147 : vector<8x32xf32>
    %149 = vector.extract_strided_slice %143 {offsets = [0, 0], sizes = [1, 32], strides = [1, 1]} : vector<1x96xf32> to vector<1x32xf32>
    %150 = vector.broadcast %149 : vector<1x32xf32> to vector<8x32xf32>
    %151 = arith.mulf %148, %150 : vector<8x32xf32>
    %152 = vector.extract_strided_slice %144 {offsets = [0, 0], sizes = [1, 32], strides = [1, 1]} : vector<1x96xf32> to vector<1x32xf32>
    %153 = vector.broadcast %152 : vector<1x32xf32> to vector<8x32xf32>
    %154 = arith.addf %151, %153 : vector<8x32xf32>
    %155 = vector.broadcast %120 : vector<8x1xf32> to vector<8x32xf32>
    %156 = arith.subf %103, %155 : vector<8x32xf32>
    %157 = vector.broadcast %142 : vector<8x1xf32> to vector<8x32xf32>
    %158 = arith.mulf %156, %157 : vector<8x32xf32>
    %159 = vector.extract_strided_slice %143 {offsets = [0, 32], sizes = [1, 32], strides = [1, 1]} : vector<1x96xf32> to vector<1x32xf32>
    %160 = vector.broadcast %159 : vector<1x32xf32> to vector<8x32xf32>
    %161 = arith.mulf %158, %160 : vector<8x32xf32>
    %162 = vector.extract_strided_slice %144 {offsets = [0, 32], sizes = [1, 32], strides = [1, 1]} : vector<1x96xf32> to vector<1x32xf32>
    %163 = vector.broadcast %162 : vector<1x32xf32> to vector<8x32xf32>
    %164 = arith.addf %161, %163 : vector<8x32xf32>
    %165 = vector.broadcast %120 : vector<8x1xf32> to vector<8x32xf32>
    %166 = arith.subf %110, %165 : vector<8x32xf32>
    %167 = vector.broadcast %142 : vector<8x1xf32> to vector<8x32xf32>
    %168 = arith.mulf %166, %167 : vector<8x32xf32>
    %169 = vector.extract_strided_slice %143 {offsets = [0, 64], sizes = [1, 32], strides = [1, 1]} : vector<1x96xf32> to vector<1x32xf32>
    %170 = vector.broadcast %169 : vector<1x32xf32> to vector<8x32xf32>
    %171 = arith.mulf %168, %170 : vector<8x32xf32>
    %172 = vector.extract_strided_slice %144 {offsets = [0, 64], sizes = [1, 32], strides = [1, 1]} : vector<1x96xf32> to vector<1x32xf32>
    %173 = vector.broadcast %172 : vector<1x32xf32> to vector<8x32xf32>
    %174 = arith.addf %171, %173 : vector<8x32xf32>
    %175 = arith.truncf %154 : vector<8x32xf32> to vector<8x32xbf16>
    %c0_63 = arith.constant 0 : index
    %c0_64 = arith.constant 0 : index
    %c0_65 = arith.constant 0 : index
    %176 = vector.load %arg9[%c0_63, %c0_64, %c0_65] : memref<3x32x4xbf16, #tpu.memory_space<vmem>>, vector<1x32x4xbf16>
    %177 = vector.shape_cast %176 : vector<1x32x4xbf16> to vector<32x4xbf16>
    %cst_66 = arith.constant dense<0.000000e+00> : vector<8x4xf32>
    %178 = tpu.matmul %175, %177, %cst_66 {dimension_numbers = #tpu.dot_dimension_numbers<[1], [0], [0], [1], [0, 0, 1, 1], [], []>} : vector<8x32xbf16>, vector<32x4xbf16>, vector<8x4xf32> -> vector<8x4xf32>
    %179 = arith.truncf %164 : vector<8x32xf32> to vector<8x32xbf16>
    %c1_67 = arith.constant 1 : index
    %c0_68 = arith.constant 0 : index
    %c0_69 = arith.constant 0 : index
    %180 = vector.load %arg9[%c1_67, %c0_68, %c0_69] : memref<3x32x4xbf16, #tpu.memory_space<vmem>>, vector<1x32x4xbf16>
    %181 = vector.shape_cast %180 : vector<1x32x4xbf16> to vector<32x4xbf16>
    %cst_70 = arith.constant dense<0.000000e+00> : vector<8x4xf32>
    %182 = tpu.matmul %179, %181, %cst_70 {dimension_numbers = #tpu.dot_dimension_numbers<[1], [0], [0], [1], [0, 0, 1, 1], [], []>} : vector<8x32xbf16>, vector<32x4xbf16>, vector<8x4xf32> -> vector<8x4xf32>
    %183 = arith.addf %178, %182 : vector<8x4xf32>
    %184 = arith.truncf %174 : vector<8x32xf32> to vector<8x32xbf16>
    %c2 = arith.constant 2 : index
    %c0_71 = arith.constant 0 : index
    %c0_72 = arith.constant 0 : index
    %185 = vector.load %arg9[%c2, %c0_71, %c0_72] : memref<3x32x4xbf16, #tpu.memory_space<vmem>>, vector<1x32x4xbf16>
    %186 = vector.shape_cast %185 : vector<1x32x4xbf16> to vector<32x4xbf16>
    %cst_73 = arith.constant dense<0.000000e+00> : vector<8x4xf32>
    %187 = tpu.matmul %184, %186, %cst_73 {dimension_numbers = #tpu.dot_dimension_numbers<[1], [0], [0], [1], [0, 0, 1, 1], [], []>} : vector<8x32xbf16>, vector<32x4xbf16>, vector<8x4xf32> -> vector<8x4xf32>
    %188 = arith.addf %183, %187 : vector<8x4xf32>
    %189 = vector.extract_strided_slice %0 {offsets = [11, 0], sizes = [1, 4], strides = [1, 1]} : vector<12x160xf32> to vector<1x4xf32>
    %190 = vector.broadcast %189 : vector<1x4xf32> to vector<8x4xf32>
    %191 = arith.addf %188, %190 : vector<8x4xf32>
    %c0_74 = arith.constant 0 : index
    %c0_75 = arith.constant 0 : index
    %192 = vector.load %arg11[%c0_74, %c0_75] : memref<8x4xf32, #tpu.memory_space<vmem>>, vector<8x4xf32>
    tpu.vector_store %arg11[%c0_74, %c0_75], %191 {strides = array<i32>} : memref<8x4xf32, #tpu.memory_space<vmem>>, vector<8x4xf32>,
    return
  }
  func.func @transform_0(%arg0: i32) -> (i32, i32) {
    %c0_i32 = arith.constant 0 : i32
    %c0_i32_0 = arith.constant 0 : i32
    %c0_i32_1 = arith.constant 0 : i32
    return %c0_i32, %c0_i32_0 : i32, i32
  }
  func.func @transform_1(%arg0: i32) -> (i32, i32) {
    %c0_i32 = arith.constant 0 : i32
    %c0_i32_0 = arith.constant 0 : i32
    %c0_i32_1 = arith.constant 0 : i32
    return %c0_i32, %c0_i32_0 : i32, i32
  }
  func.func @transform_2(%arg0: i32) -> (i32, i32) {
    %c0_i32 = arith.constant 0 : i32
    %c0_i32_0 = arith.constant 0 : i32
    %c0_i32_1 = arith.constant 0 : i32
    return %c0_i32, %c0_i32_0 : i32, i32
  }
  func.func @transform_3(%arg0: i32) -> (i32, i32, i32, i32) {
    %c0_i32 = arith.constant 0 : i32
    %c0_i32_0 = arith.constant 0 : i32
    %c0_i32_1 = arith.constant 0 : i32
    %c0_i32_2 = arith.constant 0 : i32
    %c0_i32_3 = arith.constant 0 : i32
    return %c0_i32, %c0_i32_0, %c0_i32_1, %c0_i32_2 : i32, i32, i32, i32
  }
  func.func @transform_4(%arg0: i32) -> (i32, i32, i32) {
    %c0_i32 = arith.constant 0 : i32
    %c0_i32_0 = arith.constant 0 : i32
    %c0_i32_1 = arith.constant 0 : i32
    %c0_i32_2 = arith.constant 0 : i32
    return %c0_i32, %c0_i32_0, %c0_i32_1 : i32, i32, i32
  }
  func.func @transform_5(%arg0: i32) -> (i32, i32, i32) {
    %c0_i32 = arith.constant 0 : i32
    %c0_i32_0 = arith.constant 0 : i32
    %c0_i32_1 = arith.constant 0 : i32
    %c0_i32_2 = arith.constant 0 : i32
    return %c0_i32, %c0_i32_0, %c0_i32_1 : i32, i32, i32
  }
  func.func @transform_6(%arg0: i32) -> (i32, i32) {
    %c0_i32 = arith.constant 0 : i32
    %c0_i32_0 = arith.constant 0 : i32
    %c0_i32_1 = arith.constant 0 : i32
    return %c0_i32, %c0_i32_0 : i32, i32
  }
  func.func @transform_7(%arg0: i32) -> (i32, i32) {
    %c0_i32 = arith.constant 0 : i32
    %c0_i32_0 = arith.constant 0 : i32
    %c0_i32_1 = arith.constant 0 : i32
    return %c0_i32, %c0_i32_0 : i32, i32
  }
  func.func @transform_8(%arg0: i32) -> (i32, i32, i32) {
    %c0_i32 = arith.constant 0 : i32
    %c0_i32_0 = arith.constant 0 : i32
    %c0_i32_1 = arith.constant 0 : i32
    %c0_i32_2 = arith.constant 0 : i32
    return %c0_i32, %c0_i32_0, %c0_i32_1 : i32, i32, i32
  }
  func.func @transform_9(%arg0: i32) -> (i32, i32) {
    %c0_i32 = arith.constant 0 : i32
    %c0_i32_0 = arith.constant 0 : i32
    %c0_i32_1 = arith.constant 0 : i32
    return %c0_i32, %c0_i32_0 : i32, i32
  }
  func.func @transform_10(%arg0: i32) -> (i32, i32) {
    %c0_i32 = arith.constant 0 : i32
    %c0_i32_0 = arith.constant 0 : i32
    %c0_i32_1 = arith.constant 0 : i32
    return %c0_i32, %c0_i32_0 : i32, i32
  }
}

</mosaic_0001>

<llo_original>
// kernel: tpu_custom_call.1
$region0: #{tpu_custom_call.1}
  #allocation0 [shape = 'u32[]', space=smem, size = 0x4, offset = 0x4, fixed_abs, tag = 'smem constant byte address 0x4 - core index']
  #allocation1 [shape = 'u32[144,128]{1,0:T(1,128)}', space=vmem, size = 0x12000, scoped, tag = 'internal scratch']
  %s0 = inlined_call_operand.vmem [shape: bf16[64,32], index: 0, kind: input, shape index: {}]
  %s1 = inlined_call_operand.hbm [shape: bf16[56,56], index: 1, kind: input, shape index: {}]
  %s2 = inlined_call_operand.hbm [shape: bf16[32,32], index: 2, kind: input, shape index: {}]
  %s3 = inlined_call_operand.vmem [shape: bf16[2,2,32,64], index: 3, kind: input, shape index: {}]
  %s4 = inlined_call_operand.vmem [shape: bf16[2,32,32], index: 4, kind: input, shape index: {}]
  %s5 = inlined_call_operand.hbm [shape: bf16[2,32,32], index: 5, kind: input, shape index: {}]
  %s6 = inlined_call_operand.hbm [shape: bf16[32,32], index: 6, kind: input, shape index: {}]
  %s7 = inlined_call_operand.vmem [shape: bf16[32,160], index: 7, kind: input, shape index: {}]
  %s8 = inlined_call_operand.vmem [shape: bf16[3,32,4], index: 8, kind: input, shape index: {}]
  %s9 = inlined_call_operand.hbm [shape: f32[12,160], index: 9, kind: input, shape index: {}]
  %s10 = inlined_call_operand.vmem [shape: f32[8,4], index: 10, kind: output, shape index: {}]
  %s11 = sld [smem:[#allocation0]]
  $region70: #{tpu_custom_call.1} parent=0
    _
  %s13 = ssub.s32 1, %s11
  %s14 = scalar_select 0, %s13, %s11
  $region1: #{tpu_custom_call.1} parent=0
    #allocation2 [shape = 'u8[14336]{0}', space=vmem, size = 0x3800, scoped, tag = 'input window, operand 1, single buffered']
    #allocation3 [shape = 's32[1]{0}', space=sflag, size = 0x4, scoped, tag = 'scoped memory for tpu_custom_call.1']
    #allocation4 [shape = 'u8[8192]{0}', space=vmem, size = 0x2000, scoped, tag = 'input window, operand 2, single buffered']
    #allocation5 [shape = 's32[1]{0}', space=sflag, size = 0x4, scoped, tag = 'scoped memory for tpu_custom_call.1']
    #allocation6 [shape = 'u8[16384]{0}', space=vmem, size = 0x4000, scoped, tag = 'input window, operand 5, single buffered']
    #allocation7 [shape = 'u8[8192]{0}', space=vmem, size = 0x2000, scoped, tag = 'input window, operand 6, single buffered']
    #allocation8 [shape = 's32[1]{0}', space=sflag, size = 0x4, scoped, tag = 'scoped memory for tpu_custom_call.1']
    #allocation9 [shape = 'u8[16384]{0}', space=vmem, size = 0x4000, scoped, tag = 'input window, operand 9, single buffered']
    %15 = vsyncpa [#allocation3], 0
    %16 = vsyncpa [#allocation5], 0
    %17 = vsyncpa [#allocation8], 0
    // Predicated region
    $region2: #{tpu_custom_call.1} parent=1 // pred_check
      _
    $region3: #{tpu_custom_call.1} parent=1 // pred_check_branch
      %19 = sbr.rel (0) target = $region5
    $region4: #{tpu_custom_call.1} parent=1 // pred_region
      _
    $region5: #{tpu_custom_call.1} parent=1 // pred_fallthru
      _
    // Predicated region
    $region6: #{tpu_custom_call.1} parent=1 // pred_check
      _
    $region7: #{tpu_custom_call.1} parent=1 // pred_check_branch
      %21 = sbr.rel (0) target = $region9
    $region8: #{tpu_custom_call.1} parent=1 // pred_region
      %s23 = ssub.s32 448, 448
      %24 = vsyncadd [#allocation3], %s23
      %s25 = sshll.u32 [#allocation2], 4
      %s26 = int_to_ptr.vmem [resolvable:$true] %s25
      %31 = dma.hbm_to_vmem [thread:$0]  %s1, 448, %s26, [#allocation3], 64, 64, 4
    $region9: #{tpu_custom_call.1} parent=1 // pred_fallthru
      _
    // Predicated region
    $region10: #{tpu_custom_call.1} parent=1 // pred_check
      _
    $region11: #{tpu_custom_call.1} parent=1 // pred_check_branch
      %33 = sbr.rel (0) target = $region13
    $region12: #{tpu_custom_call.1} parent=1 // pred_region
      %s35 = ssub.s32 256, 256
      %36 = vsyncadd [#allocation5], %s35
      %s37 = sshll.u32 [#allocation4], 4
      %s38 = int_to_ptr.vmem [resolvable:$true] %s37
      %43 = dma.hbm_to_vmem [thread:$0]  %s2, 256, %s38, [#allocation5], 64, 64, 4
    $region13: #{tpu_custom_call.1} parent=1 // pred_fallthru
      _
    // Predicated region
    $region14: #{tpu_custom_call.1} parent=1 // pred_check
      _
    $region15: #{tpu_custom_call.1} parent=1 // pred_check_branch
      %45 = sbr.rel (0) target = $region17
    $region16: #{tpu_custom_call.1} parent=1 // pred_region
      _
    $region17: #{tpu_custom_call.1} parent=1 // pred_fallthru
      _
    // Predicated region
    $region18: #{tpu_custom_call.1} parent=1 // pred_check
      _
    $region19: #{tpu_custom_call.1} parent=1 // pred_check_branch
      %47 = sbr.rel (0) target = $region21
    $region20: #{tpu_custom_call.1} parent=1 // pred_region
      _
    $region21: #{tpu_custom_call.1} parent=1 // pred_fallthru
      _
    // Predicated region
    $region22: #{tpu_custom_call.1} parent=1 // pred_check
      _
    $region23: #{tpu_custom_call.1} parent=1 // pred_check_branch
      %49 = sbr.rel (0) target = $region25
    $region24: #{tpu_custom_call.1} parent=1 // pred_region
      %s51 = ssub.s32 512, 512
      %52 = vsyncadd [#allocation5], %s51
      %s53 = sshll.u32 [#allocation6], 4
      %s54 = int_to_ptr.vmem [resolvable:$true] %s53
      %59 = dma.hbm_to_vmem [thread:$0]  %s5, 512, %s54, [#allocation5], 64, 64, 4
    $region25: #{tpu_custom_call.1} parent=1 // pred_fallthru
      _
    // Predicated region
    $region26: #{tpu_custom_call.1} parent=1 // pred_check
      _
    $region27: #{tpu_custom_call.1} parent=1 // pred_check_branch
      %61 = sbr.rel (0) target = $region29
    $region28: #{tpu_custom_call.1} parent=1 // pred_region
      %s63 = ssub.s32 256, 256
      %64 = vsyncadd [#allocation8], %s63
      %s65 = sshll.u32 [#allocation7], 4
      %s66 = int_to_ptr.vmem [resolvable:$true] %s65
      %71 = dma.hbm_to_vmem [thread:$0]  %s6, 256, %s66, [#allocation8], 64, 64, 4
    $region29: #{tpu_custom_call.1} parent=1 // pred_fallthru
      _
    // Predicated region
    $region30: #{tpu_custom_call.1} parent=1 // pred_check
      _
    $region31: #{tpu_custom_call.1} parent=1 // pred_check_branch
      %73 = sbr.rel (0) target = $region33
    $region32: #{tpu_custom_call.1} parent=1 // pred_region
      _
    $region33: #{tpu_custom_call.1} parent=1 // pred_fallthru
      _
    // Predicated region
    $region34: #{tpu_custom_call.1} parent=1 // pred_check
      _
    $region35: #{tpu_custom_call.1} parent=1 // pred_check_branch
      %75 = sbr.rel (0) target = $region37
    $region36: #{tpu_custom_call.1} parent=1 // pred_region
      _
    $region37: #{tpu_custom_call.1} parent=1 // pred_fallthru
      _
    // Predicated region
    $region38: #{tpu_custom_call.1} parent=1 // pred_check
      _
    $region39: #{tpu_custom_call.1} parent=1 // pred_check_branch
      %77 = sbr.rel (0) target = $region41
    $region40: #{tpu_custom_call.1} parent=1 // pred_region
      %s79 = ssub.s32 512, 512
      %80 = vsyncadd [#allocation8], %s79
      %s81 = sshll.u32 [#allocation9], 4
      %s82 = int_to_ptr.vmem [resolvable:$true] %s81
      %87 = dma.hbm_to_vmem [thread:$0]  %s9, 512, %s82, [#allocation8], 256, 256, 16
    $region41: #{tpu_custom_call.1} parent=1 // pred_fallthru
      _
    // Predicated region
    $region42: #{tpu_custom_call.1} parent=1 // pred_check
      _
    $region43: #{tpu_custom_call.1} parent=1 // pred_check_branch
      %89 = sbr.rel (0) target = $region45
    $region44: #{tpu_custom_call.1} parent=1 // pred_region
      %90 = dma.done [#allocation3], 448
    $region45: #{tpu_custom_call.1} parent=1 // pred_fallthru
      _
    // Predicated region
    $region46: #{tpu_custom_call.1} parent=1 // pred_check
      _
    $region47: #{tpu_custom_call.1} parent=1 // pred_check_branch
      %92 = sbr.rel (0) target = $region49
    $region48: #{tpu_custom_call.1} parent=1 // pred_region
      %93 = dma.done [#allocation5], 256
    $region49: #{tpu_custom_call.1} parent=1 // pred_fallthru
      _
    // Predicated region
    $region50: #{tpu_custom_call.1} parent=1 // pred_check
      _
    $region51: #{tpu_custom_call.1} parent=1 // pred_check_branch
      %95 = sbr.rel (0) target = $region53
    $region52: #{tpu_custom_call.1} parent=1 // pred_region
      %96 = dma.done [#allocation5], 512
    $region53: #{tpu_custom_call.1} parent=1 // pred_fallthru
      _
    // Predicated region
    $region54: #{tpu_custom_call.1} parent=1 // pred_check
      _
    $region55: #{tpu_custom_call.1} parent=1 // pred_check_branch
      %98 = sbr.rel (0) target = $region57
    $region56: #{tpu_custom_call.1} parent=1 // pred_region
      %99 = dma.done [#allocation8], 256
    $region57: #{tpu_custom_call.1} parent=1 // pred_fallthru
      _
    // Predicated region
    $region58: #{tpu_custom_call.1} parent=1 // pred_check
      _
    $region59: #{tpu_custom_call.1} parent=1 // pred_check_branch
      %101 = sbr.rel (0) target = $region61
    $region60: #{tpu_custom_call.1} parent=1 // pred_region
      %102 = dma.done [#allocation8], 512
    $region61: #{tpu_custom_call.1} parent=1 // pred_fallthru
      _
    %v104 = vld [vmem:[#allocation9] sm:$0xff]
    %v105 = vld [vmem:[#allocation9 + $0x10] sm:$0xf]
    %v106 = vld [vmem:[#allocation9 + $0x18] sm:$0xf]
    %v107 = vld [vmem:[%s0] sm:$0xf]
    %v108 = vld [vmem:[%s0 + $0x4] sm:$0xf]
    %v109 = vld [vmem:[%s0 + $0x8] sm:$0xf]
    %v110 = vld [vmem:[%s0 + $0xc] sm:$0xf]
    %v111 = vld [vmem:[%s0 + $0x10] sm:$0xf]
    %v112 = vld [vmem:[%s0 + $0x14] sm:$0xf]
    %v113 = vld [vmem:[%s0 + $0x18] sm:$0xf]
    %v114 = vld [vmem:[%s0 + $0x1c] sm:$0xf]
    %v115 = vld [vmem:[#allocation4] sm:$0xf]
    %v116 = vld [vmem:[#allocation4 + $0x4] sm:$0xf]
    %v117 = vld [vmem:[#allocation4 + $0x8] sm:$0xf]
    %v118 = vld [vmem:[#allocation4 + $0xc] sm:$0xf]
    %v119 = vlaneseq
    %v120 = vshrl.u32 %v119, 7
    %v121 = vsub.s32 0, %v120
    %v122 = vrot.slane %v104, %v121
    %v131 = vunpack.c.l.b16 %v107
    %v132 = vunpack.c.l.b16 %v108
    %v133 = vunpack.c.l.b16 %v109
    %v134 = vunpack.c.l.b16 %v110
    %v135 = vunpack.c.l.b16 %v111
    %v136 = vunpack.c.l.b16 %v112
    %v137 = vunpack.c.l.b16 %v113
    %v138 = vunpack.c.l.b16 %v114
    %v139 = vpack.c.b16 %v132, %v131
    %v140 = vpack.c.b16 %v134, %v133
    %v141 = vpack.c.b16 %v136, %v135
    %v142 = vpack.c.b16 %v138, %v137
    %v147 = vunpack.c.l.b16 %v115
    %v148 = vunpack.c.l.b16 %v116
    %v149 = vunpack.c.l.b16 %v117
    %v150 = vunpack.c.l.b16 %v118
    %v151 = vpack.c.b16 %v148, %v147
    %v152 = vpack.c.b16 %v150, %v149
    %vm155 = vcmask 261120
    %v157 = vsel %vm155, %v139, 0
    %v160 = vsel %vm155, %v140, 0
    %v163 = vsel %vm155, %v141, 0
    %v166 = vsel %vm155, %v142, 0
    %168 = vmatprep.subr.bf16.mxu0 0
    %169 = vmatpush1.bf16.msra.mxu0 %v151
    %170 = vmatprep.subr.bf16.mxu0 0
    %171 = vmatpush1.bf16.msra.mxu0 %v152
    %172 = vmatprep.subr.bf16.mxu0 0
    %173 = vmatpush1.bf16.msra.mxu0 0
    %174 = vmatprep.subr.bf16.mxu0 0
    %175 = vmatpush1.bf16.msra.mxu0 0
    %176 = vmatprep.subr.bf16.mxu0 0
    %177 = vmatpush1.bf16.msra.mxu0 0
    %178 = vmatprep.subr.bf16.mxu0 0
    %179 = vmatpush1.bf16.msra.mxu0 0
    %180 = vmatprep.subr.bf16.mxu0 0
    %181 = vmatpush1.bf16.msra.mxu0 0
    %182 = vmatprep.subr.bf16.mxu0 0
    %183 = vmatpush1.bf16.msra.mxu0 0
    %184 = vmatprep.subr.bf16.mxu0 0
    %185 = vmatpush1.bf16.msra.mxu0 0
    %186 = vmatprep.subr.bf16.mxu0 0
    %187 = vmatpush1.bf16.msra.mxu0 0
    %188 = vmatprep.subr.bf16.mxu0 0
    %189 = vmatpush1.bf16.msra.mxu0 0
    %190 = vmatprep.subr.bf16.mxu0 0
    %191 = vmatpush1.bf16.msra.mxu0 0
    %192 = vmatprep.subr.bf16.mxu0 0
    %193 = vmatpush1.bf16.msra.mxu0 0
    %194 = vmatprep.subr.bf16.mxu0 0
    %195 = vmatpush1.bf16.msra.mxu0 0
    %196 = vmatprep.subr.bf16.mxu0 0
    %197 = vmatpush1.bf16.msra.mxu0 0
    %198 = vmatprep.subr.bf16.mxu0 0
    %199 = vmatpush1.bf16.msra.mxu0 0
    %200 = vmatprep.mubr.bf16.mxu0 0
    %201 = vmatmul.mubr.bf16.gmra.mrb[0].mxu0 %v157
    %v202 = vpop.f32.mrb[0].mxu0
    %v203 = vadd.f32 %v122, %v202
    %v204 = vpop.f32.mrb[0].mxu0
    %v205 = vpop.f32.mrb[0].mxu0
    %v206 = vadd.f32 %v122, %v205
    %v207 = vpop.f32.mrb[0].mxu0
    %208 = vmatprep.mubr.bf16.mxu0 0
    %209 = vmatmul.mubr.bf16.gmra.mrb[0].mxu0 %v160
    %v210 = vpop.f32.mrb[0].mxu0
    %v211 = vadd.f32 %v122, %v210
    %v212 = vpop.f32.mrb[0].mxu0
    %v213 = vpop.f32.mrb[0].mxu0
    %v214 = vadd.f32 %v122, %v213
    %v215 = vpop.f32.mrb[0].mxu0
    %216 = vmatprep.mubr.bf16.mxu0 0
    %217 = vmatmul.mubr.bf16.gmra.mrb[0].mxu0 %v163
    %v218 = vpop.f32.mrb[0].mxu0
    %v219 = vadd.f32 %v122, %v218
    %v220 = vpop.f32.mrb[0].mxu0
    %v221 = vpop.f32.mrb[0].mxu0
    %v222 = vadd.f32 %v122, %v221
    %v223 = vpop.f32.mrb[0].mxu0
    %224 = vmatprep.mubr.bf16.mxu0 0
    %225 = vmatmul.mubr.bf16.gmra.mrb[0].mxu0 %v166
    %v226 = vpop.f32.mrb[0].mxu0
    %v227 = vadd.f32 %v122, %v226
    %v228 = vpop.f32.mrb[0].mxu0
    %v229 = vpop.f32.mrb[0].mxu0
    %v230 = vadd.f32 %v122, %v229
    %v231 = vpop.f32.mrb[0].mxu0
    %232 = vdwg.mxu0
    %v233 = vpack.c.bf16 %v206, %v203
    %v234 = vpack.c.bf16 %v214, %v211
    %v235 = vpack.c.bf16 %v222, %v219
    %v236 = vpack.c.bf16 %v230, %v227
    %v237 = vld [vmem:[%s3] sm:$0xf]
    %v238 = vld [vmem:[%s3 + $0x4] sm:$0xf]
    %v239 = vld [vmem:[%s3 + $0x8] sm:$0xf]
    %v240 = vld [vmem:[%s3 + $0xc] sm:$0xf]
    %s241 = scalar_lea.vmem %s3, 16
    %v242 = vld [vmem:[%s241] sm:$0xf]
    %v243 = vld [vmem:[%s241 + $0x4] sm:$0xf]
    %v244 = vld [vmem:[%s241 + $0x8] sm:$0xf]
    %v245 = vld [vmem:[%s241 + $0xc] sm:$0xf]
    %vm250 = vcmask 1043456
    %v251 = vrot.slane %v233, 4
    %v252 = vrot.slane %v234, 4
    %v253 = vsel %vm250, %v251, %v252
    %v254 = vrot.slane %v235, 4
    %v255 = vsel %vm250, %v252, %v254
    %v256 = vrot.slane %v236, 4
    %v257 = vsel %vm250, %v254, %v256
    %v262 = vunpack.c.l.b16 %v242
    %v263 = vunpack.c.l.b16 %v243
    %v264 = vunpack.c.l.b16 %v244
    %v265 = vunpack.c.l.b16 %v245
    %v266 = vpack.c.b16 %v263, %v262
    %v267 = vpack.c.b16 %v265, %v264
    %v271 = vsel %vm155, %v253, 0
    %v274 = vsel %vm155, %v255, 0
    %v277 = vsel %vm155, %v257, 0
    %v280 = vsel %vm155, %v256, 0
    %282 = vmatprep.subr.bf16.mxu0 0
    %283 = vmatpush1.bf16.msra.mxu0 %v266
    %284 = vmatprep.subr.bf16.mxu0 0
    %285 = vmatpush1.bf16.msra.mxu0 %v267
    %286 = vmatprep.subr.bf16.mxu0 0
    %287 = vmatpush1.bf16.msra.mxu0 0
    %288 = vmatprep.subr.bf16.mxu0 0
    %289 = vmatpush1.bf16.msra.mxu0 0
    %290 = vmatprep.subr.bf16.mxu0 0
    %291 = vmatpush1.bf16.msra.mxu0 0
    %292 = vmatprep.subr.bf16.mxu0 0
    %293 = vmatpush1.bf16.msra.mxu0 0
    %294 = vmatprep.subr.bf16.mxu0 0
    %295 = vmatpush1.bf16.msra.mxu0 0
    %296 = vmatprep.subr.bf16.mxu0 0
    %297 = vmatpush1.bf16.msra.mxu0 0
    %298 = vmatprep.subr.bf16.mxu0 0
    %299 = vmatpush1.bf16.msra.mxu0 0
    %300 = vmatprep.subr.bf16.mxu0 0
    %301 = vmatpush1.bf16.msra.mxu0 0
    %302 = vmatprep.subr.bf16.mxu0 0
    %303 = vmatpush1.bf16.msra.mxu0 0
    %304 = vmatprep.subr.bf16.mxu0 0
    %305 = vmatpush1.bf16.msra.mxu0 0
    %306 = vmatprep.subr.bf16.mxu0 0
    %307 = vmatpush1.bf16.msra.mxu0 0
    %308 = vmatprep.subr.bf16.mxu0 0
    %309 = vmatpush1.bf16.msra.mxu0 0
    %310 = vmatprep.subr.bf16.mxu0 0
    %311 = vmatpush1.bf16.msra.mxu0 0
    %312 = vmatprep.subr.bf16.mxu0 0
    %313 = vmatpush1.bf16.msra.mxu0 0
    %314 = vmatprep.mubr.bf16.mxu0 0
    %315 = vmatmul.mubr.bf16.gmra.mrb[0].mxu0 %v271
    %v316 = vpop.f32.mrb[0].mxu0
    %v317 = vadd.f32 0.0, %v316
    %v318 = vpop.f32.mrb[0].mxu0
    %v319 = vpop.f32.mrb[0].mxu0
    %v320 = vadd.f32 0.0, %v319
    %v321 = vpop.f32.mrb[0].mxu0
    %322 = vmatprep.mubr.bf16.mxu0 0
    %323 = vmatmul.mubr.bf16.gmra.mrb[0].mxu0 %v274
    %v324 = vpop.f32.mrb[0].mxu0
    %v325 = vadd.f32 0.0, %v324
    %v326 = vpop.f32.mrb[0].mxu0
    %v327 = vpop.f32.mrb[0].mxu0
    %v328 = vadd.f32 0.0, %v327
    %v329 = vpop.f32.mrb[0].mxu0
    %330 = vmatprep.mubr.bf16.mxu0 0
    %331 = vmatmul.mubr.bf16.gmra.mrb[0].mxu0 %v277
    %v332 = vpop.f32.mrb[0].mxu0
    %v333 = vadd.f32 0.0, %v332
    %v334 = vpop.f32.mrb[0].mxu0
    %v335 = vpop.f32.mrb[0].mxu0
    %v336 = vadd.f32 0.0, %v335
    %v337 = vpop.f32.mrb[0].mxu0
    %338 = vmatprep.mubr.bf16.mxu0 0
    %339 = vmatmul.mubr.bf16.gmra.mrb[0].mxu0 %v280
    %v340 = vpop.f32.mrb[0].mxu0
    %v341 = vadd.f32 0.0, %v340
    %v342 = vpop.f32.mrb[0].mxu0
    %v343 = vpop.f32.mrb[0].mxu0
    %v344 = vpop.f32.mrb[0].mxu0
    %345 = vdwg.mxu0
    %v350 = vunpack.c.l.b16 %v237
    %v351 = vunpack.c.l.b16 %v238
    %v352 = vunpack.c.l.b16 %v239
    %v353 = vunpack.c.l.b16 %v240
    %v354 = vpack.c.b16 %v351, %v350
    %v355 = vpack.c.b16 %v353, %v352
    %v359 = vsel %vm155, %v233, 0
    %v362 = vsel %vm155, %v234, 0
    %v365 = vsel %vm155, %v235, 0
    %v368 = vsel %vm155, %v236, 0
    %370 = vmatprep.subr.bf16.mxu0 0
    %371 = vmatpush1.bf16.msra.mxu0 %v354
    %372 = vmatprep.subr.bf16.mxu0 0
    %373 = vmatpush1.bf16.msra.mxu0 %v355
    %374 = vmatprep.subr.bf16.mxu0 0
    %375 = vmatpush1.bf16.msra.mxu0 0
    %376 = vmatprep.subr.bf16.mxu0 0
    %377 = vmatpush1.bf16.msra.mxu0 0
    %378 = vmatprep.subr.bf16.mxu0 0
    %379 = vmatpush1.bf16.msra.mxu0 0
    %380 = vmatprep.subr.bf16.mxu0 0
    %381 = vmatpush1.bf16.msra.mxu0 0
    %382 = vmatprep.subr.bf16.mxu0 0
    %383 = vmatpush1.bf16.msra.mxu0 0
    %384 = vmatprep.subr.bf16.mxu0 0
    %385 = vmatpush1.bf16.msra.mxu0 0
    %386 = vmatprep.subr.bf16.mxu0 0
    %387 = vmatpush1.bf16.msra.mxu0 0
    %388 = vmatprep.subr.bf16.mxu0 0
    %389 = vmatpush1.bf16.msra.mxu0 0
    %390 = vmatprep.subr.bf16.mxu0 0
    %391 = vmatpush1.bf16.msra.mxu0 0
    %392 = vmatprep.subr.bf16.mxu0 0
    %393 = vmatpush1.bf16.msra.mxu0 0
    %394 = vmatprep.subr.bf16.mxu0 0
    %395 = vmatpush1.bf16.msra.mxu0 0
    %396 = vmatprep.subr.bf16.mxu0 0
    %397 = vmatpush1.bf16.msra.mxu0 0
    %398 = vmatprep.subr.bf16.mxu0 0
    %399 = vmatpush1.bf16.msra.mxu0 0
    %400 = vmatprep.subr.bf16.mxu0 0
    %401 = vmatpush1.bf16.msra.mxu0 0
    %402 = vmatprep.mubr.bf16.mxu0 0
    %403 = vmatmul.mubr.bf16.gmra.mrb[0].mxu0 %v359
    %v404 = vpop.f32.mrb[0].mxu0
    %v405 = vadd.f32 %v317, %v404
    %v406 = vpop.f32.mrb[0].mxu0
    %v407 = vpop.f32.mrb[0].mxu0
    %v408 = vadd.f32 %v320, %v407
    %v409 = vpop.f32.mrb[0].mxu0
    %410 = vmatprep.mubr.bf16.mxu0 0
    %411 = vmatmul.mubr.bf16.gmra.mrb[0].mxu0 %v362
    %v412 = vpop.f32.mrb[0].mxu0
    %v413 = vadd.f32 %v325, %v412
    %v414 = vpop.f32.mrb[0].mxu0
    %v415 = vpop.f32.mrb[0].mxu0
    %v416 = vadd.f32 %v328, %v415
    %v417 = vpop.f32.mrb[0].mxu0
    %418 = vmatprep.mubr.bf16.mxu0 0
    %419 = vmatmul.mubr.bf16.gmra.mrb[0].mxu0 %v365
    %v420 = vpop.f32.mrb[0].mxu0
    %v421 = vadd.f32 %v333, %v420
    %v422 = vpop.f32.mrb[0].mxu0
    %v423 = vpop.f32.mrb[0].mxu0
    %v424 = vadd.f32 %v336, %v423
    %v425 = vpop.f32.mrb[0].mxu0
    %426 = vmatprep.mubr.bf16.mxu0 0
    %427 = vmatmul.mubr.bf16.gmra.mrb[0].mxu0 %v368
    %v428 = vpop.f32.mrb[0].mxu0
    %v429 = vadd.f32 %v341, %v428
    %v430 = vpop.f32.mrb[0].mxu0
    %v431 = vpop.f32.mrb[0].mxu0
    %v432 = vpop.f32.mrb[0].mxu0
    %433 = vdwg.mxu0
    %v434 = vlaneseq
    %v435 = vshrl.u32 %v434, 7
    %v436 = vsub.s32 1, %v435
    %v437 = vrot.slane %v104, %v436
    %v438 = vadd.f32 %v405, %v437
    %v439 = vadd.f32 %v408, %v437
    %v440 = vadd.f32 %v413, %v437
    %v441 = vadd.f32 %v416, %v437
    %v442 = vadd.f32 %v421, %v437
    %v443 = vadd.f32 %v424, %v437
    %v444 = vadd.f32 %v429, %v437
    %v445 = vtanh.pop %v438
    %v446 = vtanh.pop %v439
    %v447 = vtanh.pop %v440
    %v448 = vtanh.pop %v441
    %v449 = vtanh.pop %v442
    %v450 = vtanh.pop %v443
    %v451 = vtanh.pop %v444
    %v452 = vmul.f32 %v438, 0.5
    %v453 = vmul.f32 %v439, 0.5
    %v454 = vmul.f32 %v440, 0.5
    %v455 = vmul.f32 %v441, 0.5
    %v456 = vmul.f32 %v442, 0.5
    %v457 = vmul.f32 %v443, 0.5
    %v458 = vmul.f32 %v444, 0.5
    %v459 = vtanh.pop %v452
    %v460 = vtanh.pop %v453
    %v461 = vtanh.pop %v454
    %v462 = vtanh.pop %v455
    %v463 = vtanh.pop %v456
    %v464 = vtanh.pop %v457
    %v465 = vtanh.pop %v458
    %v466 = vadd.f32 %v459, 1.0
    %v467 = vadd.f32 %v460, 1.0
    %v468 = vadd.f32 %v461, 1.0
    %v469 = vadd.f32 %v462, 1.0
    %v470 = vadd.f32 %v463, 1.0
    %v471 = vadd.f32 %v464, 1.0
    %v472 = vadd.f32 %v465, 1.0
    %v473 = vmul.f32 %v466, 0.5
    %v474 = vmul.f32 %v467, 0.5
    %v475 = vmul.f32 %v468, 0.5
    %v476 = vmul.f32 %v469, 0.5
    %v477 = vmul.f32 %v470, 0.5
    %v478 = vmul.f32 %v471, 0.5
    %v479 = vmul.f32 %v472, 0.5
    %487 = vrot.lane.b32.xlu0 %v473, 96
    %v488 = vpop.permute.xlu0 %487
    %489 = vrot.lane.b32.xlu0 %v474, 96
    %v490 = vpop.permute.xlu0 %489
    %491 = vrot.lane.b32.xlu0 %v475, 96
    %v492 = vpop.permute.xlu0 %491
    %493 = vrot.lane.b32.xlu0 %v476, 96
    %v494 = vpop.permute.xlu0 %493
    %495 = vrot.lane.b32.xlu0 %v477, 96
    %v496 = vpop.permute.xlu0 %495
    %497 = vrot.lane.b32.xlu0 %v478, 96
    %v498 = vpop.permute.xlu0 %497
    %499 = vrot.lane.b32.xlu0 %v479, 96
    %v500 = vpop.permute.xlu0 %499
    %v508 = vmul.f32 %v445, %v488
    %v509 = vmul.f32 %v446, %v490
    %v510 = vmul.f32 %v447, %v492
    %v511 = vmul.f32 %v448, %v494
    %v512 = vmul.f32 %v449, %v496
    %v513 = vmul.f32 %v450, %v498
    %v514 = vmul.f32 %v451, %v500
    %v515 = vpack.c.bf16 %v514, %v514
    %v516 = vld [vmem:[%s4] sm:$0xf]
    %v517 = vld [vmem:[%s4 + $0x4] sm:$0xf]
    %v518 = vld [vmem:[%s4 + $0x8] sm:$0xf]
    %v519 = vld [vmem:[%s4 + $0xc] sm:$0xf]
    %v520 = vlaneseq
    %v521 = vshrl.u32 %v520, 7
    %v522 = vsub.s32 3, %v521
    %v523 = vrot.slane %v104, %v522
    %v528 = vunpack.c.l.b16 %v516
    %v529 = vunpack.c.l.b16 %v517
    %v530 = vunpack.c.l.b16 %v518
    %v531 = vunpack.c.l.b16 %v519
    %v532 = vpack.c.b16 %v529, %v528
    %v533 = vpack.c.b16 %v531, %v530
    %v537 = vsel %vm155, %v515, 0
    %539 = vmatprep.subr.bf16.mxu0 0
    %540 = vmatpush1.bf16.msra.mxu0 %v532
    %541 = vmatprep.subr.bf16.mxu0 0
    %542 = vmatpush1.bf16.msra.mxu0 %v533
    %543 = vmatprep.subr.bf16.mxu0 0
    %544 = vmatpush1.bf16.msra.mxu0 0
    %545 = vmatprep.subr.bf16.mxu0 0
    %546 = vmatpush1.bf16.msra.mxu0 0
    %547 = vmatprep.subr.bf16.mxu0 0
    %548 = vmatpush1.bf16.msra.mxu0 0
    %549 = vmatprep.subr.bf16.mxu0 0
    %550 = vmatpush1.bf16.msra.mxu0 0
    %551 = vmatprep.subr.bf16.mxu0 0
    %552 = vmatpush1.bf16.msra.mxu0 0
    %553 = vmatprep.subr.bf16.mxu0 0
    %554 = vmatpush1.bf16.msra.mxu0 0
    %555 = vmatprep.subr.bf16.mxu0 0
    %556 = vmatpush1.bf16.msra.mxu0 0
    %557 = vmatprep.subr.bf16.mxu0 0
    %558 = vmatpush1.bf16.msra.mxu0 0
    %559 = vmatprep.subr.bf16.mxu0 0
    %560 = vmatpush1.bf16.msra.mxu0 0
    %561 = vmatprep.subr.bf16.mxu0 0
    %562 = vmatpush1.bf16.msra.mxu0 0
    %563 = vmatprep.subr.bf16.mxu0 0
    %564 = vmatpush1.bf16.msra.mxu0 0
    %565 = vmatprep.subr.bf16.mxu0 0
    %566 = vmatpush1.bf16.msra.mxu0 0
    %567 = vmatprep.subr.bf16.mxu0 0
    %568 = vmatpush1.bf16.msra.mxu0 0
    %569 = vmatprep.subr.bf16.mxu0 0
    %570 = vmatpush1.bf16.msra.mxu0 0
    %571 = vmatprep.mubr.bf16.mxu0 0
    %572 = vmatmul.mubr.bf16.gmra.mrb[0].mxu0 %v537
    %v573 = vpop.f32.mrb[0].mxu0
    %v574 = vadd.f32 %v523, %v573
    %v575 = vpop.f32.mrb[0].mxu0
    %v576 = vpop.f32.mrb[0].mxu0
    %v577 = vpop.f32.mrb[0].mxu0
    %578 = vdwg.mxu0
    %v579 = vpack.c.bf16 %v509, %v508
    %v580 = vpack.c.bf16 %v511, %v510
    %v581 = vpack.c.bf16 %v513, %v512
    %v582 = vld [vmem:[#allocation6] sm:$0xf]
    %v583 = vld [vmem:[#allocation6 + $0x4] sm:$0xf]
    %v584 = vld [vmem:[#allocation6 + $0x8] sm:$0xf]
    %v585 = vld [vmem:[#allocation6 + $0xc] sm:$0xf]
    %v590 = vunpack.c.l.b16 %v582
    %v591 = vunpack.c.l.b16 %v583
    %v592 = vunpack.c.l.b16 %v584
    %v593 = vunpack.c.l.b16 %v585
    %v594 = vpack.c.b16 %v591, %v590
    %v595 = vpack.c.b16 %v593, %v592
    %v599 = vsel %vm155, %v579, 0
    %v602 = vsel %vm155, %v580, 0
    %v605 = vsel %vm155, %v581, 0
    %607 = vmatprep.subr.bf16.mxu0 0
    %608 = vmatpush1.bf16.msra.mxu0 %v594
    %609 = vmatprep.subr.bf16.mxu0 0
    %610 = vmatpush1.bf16.msra.mxu0 %v595
    %611 = vmatprep.subr.bf16.mxu0 0
    %612 = vmatpush1.bf16.msra.mxu0 0
    %613 = vmatprep.subr.bf16.mxu0 0
    %614 = vmatpush1.bf16.msra.mxu0 0
    %615 = vmatprep.subr.bf16.mxu0 0
    %616 = vmatpush1.bf16.msra.mxu0 0
    %617 = vmatprep.subr.bf16.mxu0 0
    %618 = vmatpush1.bf16.msra.mxu0 0
    %619 = vmatprep.subr.bf16.mxu0 0
    %620 = vmatpush1.bf16.msra.mxu0 0
    %621 = vmatprep.subr.bf16.mxu0 0
    %622 = vmatpush1.bf16.msra.mxu0 0
    %623 = vmatprep.subr.bf16.mxu0 0
    %624 = vmatpush1.bf16.msra.mxu0 0
    %625 = vmatprep.subr.bf16.mxu0 0
    %626 = vmatpush1.bf16.msra.mxu0 0
    %627 = vmatprep.subr.bf16.mxu0 0
    %628 = vmatpush1.bf16.msra.mxu0 0
    %629 = vmatprep.subr.bf16.mxu0 0
    %630 = vmatpush1.bf16.msra.mxu0 0
    %631 = vmatprep.subr.bf16.mxu0 0
    %632 = vmatpush1.bf16.msra.mxu0 0
    %633 = vmatprep.subr.bf16.mxu0 0
    %634 = vmatpush1.bf16.msra.mxu0 0
    %635 = vmatprep.subr.bf16.mxu0 0
    %636 = vmatpush1.bf16.msra.mxu0 0
    %637 = vmatprep.subr.bf16.mxu0 0
    %638 = vmatpush1.bf16.msra.mxu0 0
    %639 = vmatprep.mubr.bf16.mxu0 0
    %640 = vmatmul.mubr.bf16.gmra.mrb[0].mxu0 %v599
    %v641 = vpop.f32.mrb[0].mxu0
    %v642 = vadd.f32 0.0, %v641
    %v643 = vpop.f32.mrb[0].mxu0
    %v644 = vpop.f32.mrb[0].mxu0
    %v645 = vadd.f32 0.0, %v644
    %v646 = vpop.f32.mrb[0].mxu0
    %647 = vmatprep.mubr.bf16.mxu0 0
    %648 = vmatmul.mubr.bf16.gmra.mrb[0].mxu0 %v602
    %v649 = vpop.f32.mrb[0].mxu0
    %v650 = vadd.f32 0.0, %v649
    %v651 = vpop.f32.mrb[0].mxu0
    %v652 = vpop.f32.mrb[0].mxu0
    %v653 = vadd.f32 0.0, %v652
    %v654 = vpop.f32.mrb[0].mxu0
    %655 = vmatprep.mubr.bf16.mxu0 0
    %656 = vmatmul.mubr.bf16.gmra.mrb[0].mxu0 %v605
    %v657 = vpop.f32.mrb[0].mxu0
    %v658 = vadd.f32 0.0, %v657
    %v659 = vpop.f32.mrb[0].mxu0
    %v660 = vpop.f32.mrb[0].mxu0
    %v661 = vadd.f32 0.0, %v660
    %v662 = vpop.f32.mrb[0].mxu0
    %663 = vmatprep.mubr.bf16.mxu0 0
    %664 = vmatmul.mubr.bf16.gmra.mrb[0].mxu0 %v537
    %v665 = vpop.f32.mrb[0].mxu0
    %v666 = vadd.f32 0.0, %v665
    %v667 = vpop.f32.mrb[0].mxu0
    %v668 = vpop.f32.mrb[0].mxu0
    %v669 = vpop.f32.mrb[0].mxu0
    %670 = vdwg.mxu0
    %v671 = vld [vmem:[#allocation2] sm:$0xf]
    %v672 = vld [vmem:[#allocation2 + $0x4] sm:$0xf]
    %v673 = vld [vmem:[#allocation2 + $0x8] sm:$0xf]
    %v674 = vld [vmem:[#allocation2 + $0xc] sm:$0xf]
    %v675 = vld [vmem:[#allocation2 + $0x10] sm:$0xf]
    %v676 = vld [vmem:[#allocation2 + $0x14] sm:$0xf]
    %v677 = vld [vmem:[#allocation2 + $0x18] sm:$0xf]
    %v678 = vpack.c.bf16 %v645, %v642
    %v679 = vpack.c.bf16 %v653, %v650
    %v680 = vpack.c.bf16 %v661, %v658
    %v681 = vpack.c.bf16 %v666, %v666
    %v682 = vlaneseq
    %v683 = vshrl.u32 %v682, 7
    %v684 = vsub.s32 5, %v683
    %v685 = vrot.slane %v104, %v684
    %v693 = vunpack.c.l.b16 %v671
    %v694 = vunpack.c.l.b16 %v672
    %v695 = vunpack.c.l.b16 %v673
    %v696 = vunpack.c.l.b16 %v674
    %v697 = vunpack.c.l.b16 %v675
    %v698 = vunpack.c.l.b16 %v676
    %v699 = vunpack.c.l.b16 %v677
    %v700 = vpack.c.b16 %v694, %v693
    %v701 = vpack.c.b16 %v696, %v695
    %v702 = vpack.c.b16 %v698, %v697
    %v703 = vpack.c.b16 %v699, %v699
    %vm704 = vcmask 457728
    %v706 = vsel %vm704, %v700, 0
    %v709 = vsel %vm704, %v701, 0
    %v712 = vsel %vm704, %v702, 0
    %v715 = vsel %vm704, %v703, 0
    %vm717 = vcmask 1043456
    %v719 = vsel %vm717, %v681, 0
    %721 = vmatprep.subr.bf16.mxu0 0
    %722 = vmatpush1.bf16.msra.mxu0 %v678
    %723 = vmatprep.subr.bf16.mxu0 0
    %724 = vmatpush1.bf16.msra.mxu0 %v679
    %725 = vmatprep.subr.bf16.mxu0 0
    %726 = vmatpush1.bf16.msra.mxu0 %v680
    %727 = vmatprep.subr.bf16.mxu0 0
    %728 = vmatpush1.bf16.msra.mxu0 %v719
    %729 = vmatprep.subr.bf16.mxu0 0
    %730 = vmatpush1.bf16.msra.mxu0 0
    %731 = vmatprep.subr.bf16.mxu0 0
    %732 = vmatpush1.bf16.msra.mxu0 0
    %733 = vmatprep.subr.bf16.mxu0 0
    %734 = vmatpush1.bf16.msra.mxu0 0
    %735 = vmatprep.subr.bf16.mxu0 0
    %736 = vmatpush1.bf16.msra.mxu0 0
    %737 = vmatprep.subr.bf16.mxu0 0
    %738 = vmatpush1.bf16.msra.mxu0 0
    %739 = vmatprep.subr.bf16.mxu0 0
    %740 = vmatpush1.bf16.msra.mxu0 0
    %741 = vmatprep.subr.bf16.mxu0 0
    %742 = vmatpush1.bf16.msra.mxu0 0
    %743 = vmatprep.subr.bf16.mxu0 0
    %744 = vmatpush1.bf16.msra.mxu0 0
    %745 = vmatprep.subr.bf16.mxu0 0
    %746 = vmatpush1.bf16.msra.mxu0 0
    %747 = vmatprep.subr.bf16.mxu0 0
    %748 = vmatpush1.bf16.msra.mxu0 0
    %749 = vmatprep.subr.bf16.mxu0 0
    %750 = vmatpush1.bf16.msra.mxu0 0
    %751 = vmatprep.subr.bf16.mxu0 0
    %752 = vmatpush1.bf16.msra.mxu0 0
    %753 = vmatprep.mubr.bf16.mxu0 0
    %754 = vmatmul.mubr.bf16.gmra.mrb[0].mxu0 %v706
    %v755 = vpop.f32.mrb[0].mxu0
    %v756 = vadd.f32 %v685, %v755
    %v757 = vpop.f32.mrb[0].mxu0
    %v758 = vpop.f32.mrb[0].mxu0
    %v759 = vadd.f32 %v685, %v758
    %v760 = vpop.f32.mrb[0].mxu0
    %761 = vmatprep.mubr.bf16.mxu0 0
    %762 = vmatmul.mubr.bf16.gmra.mrb[0].mxu0 %v709
    %v763 = vpop.f32.mrb[0].mxu0
    %v764 = vadd.f32 %v685, %v763
    %v765 = vpop.f32.mrb[0].mxu0
    %v766 = vpop.f32.mrb[0].mxu0
    %v767 = vadd.f32 %v685, %v766
    %v768 = vpop.f32.mrb[0].mxu0
    %769 = vmatprep.mubr.bf16.mxu0 0
    %770 = vmatmul.mubr.bf16.gmra.mrb[0].mxu0 %v712
    %v771 = vpop.f32.mrb[0].mxu0
    %v772 = vadd.f32 %v685, %v771
    %v773 = vpop.f32.mrb[0].mxu0
    %v774 = vpop.f32.mrb[0].mxu0
    %v775 = vadd.f32 %v685, %v774
    %v776 = vpop.f32.mrb[0].mxu0
    %777 = vmatprep.mubr.bf16.mxu0 0
    %778 = vmatmul.mubr.bf16.gmra.mrb[0].mxu0 %v715
    %v779 = vpop.f32.mrb[0].mxu0
    %v780 = vadd.f32 %v685, %v779
    %v781 = vpop.f32.mrb[0].mxu0
    %v782 = vpop.f32.mrb[0].mxu0
    %v783 = vpop.f32.mrb[0].mxu0
    %784 = vdwg.mxu0
    %v785 = vadd.f32 %v756, %v206
    %v786 = vadd.f32 %v759, %v211
    %v787 = vadd.f32 %v764, %v214
    %v788 = vadd.f32 %v767, %v219
    %v789 = vadd.f32 %v772, %v222
    %v790 = vadd.f32 %v775, %v227
    %v791 = vadd.f32 %v780, %v230
    %v792 = vpack.c.bf16 %v786, %v785
    %v793 = vpack.c.bf16 %v788, %v787
    %v794 = vpack.c.bf16 %v790, %v789
    %v795 = vpack.c.bf16 %v791, %v791
    %s796 = scalar_lea.vmem %s3, 32
    %v797 = vld [vmem:[%s796] sm:$0xf]
    %v798 = vld [vmem:[%s796 + $0x4] sm:$0xf]
    %v799 = vld [vmem:[%s796 + $0x8] sm:$0xf]
    %v800 = vld [vmem:[%s796 + $0xc] sm:$0xf]
    %s801 = scalar_lea.vmem %s3, 48
    %v802 = vld [vmem:[%s801] sm:$0xf]
    %v803 = vld [vmem:[%s801 + $0x4] sm:$0xf]
    %v804 = vld [vmem:[%s801 + $0x8] sm:$0xf]
    %v805 = vld [vmem:[%s801 + $0xc] sm:$0xf]
    %v810 = vunpack.c.l.b16 %v802
    %v811 = vunpack.c.l.b16 %v803
    %v812 = vunpack.c.l.b16 %v804
    %v813 = vunpack.c.l.b16 %v805
    %v814 = vpack.c.b16 %v811, %v810
    %v815 = vpack.c.b16 %v813, %v812
    %v819 = vsel %vm155, %v793, 0
    %v822 = vsel %vm155, %v794, 0
    %v825 = vsel %vm155, %v795, 0
    %827 = vmatprep.subr.bf16.mxu0 0
    %828 = vmatpush1.bf16.msra.mxu0 %v814
    %829 = vmatprep.subr.bf16.mxu0 0
    %830 = vmatpush1.bf16.msra.mxu0 %v815
    %831 = vmatprep.subr.bf16.mxu0 0
    %832 = vmatpush1.bf16.msra.mxu0 0
    %833 = vmatprep.subr.bf16.mxu0 0
    %834 = vmatpush1.bf16.msra.mxu0 0
    %835 = vmatprep.subr.bf16.mxu0 0
    %836 = vmatpush1.bf16.msra.mxu0 0
    %837 = vmatprep.subr.bf16.mxu0 0
    %838 = vmatpush1.bf16.msra.mxu0 0
    %839 = vmatprep.subr.bf16.mxu0 0
    %840 = vmatpush1.bf16.msra.mxu0 0
    %841 = vmatprep.subr.bf16.mxu0 0
    %842 = vmatpush1.bf16.msra.mxu0 0
    %843 = vmatprep.subr.bf16.mxu0 0
    %844 = vmatpush1.bf16.msra.mxu0 0
    %845 = vmatprep.subr.bf16.mxu0 0
    %846 = vmatpush1.bf16.msra.mxu0 0
    %847 = vmatprep.subr.bf16.mxu0 0
    %848 = vmatpush1.bf16.msra.mxu0 0
    %849 = vmatprep.subr.bf16.mxu0 0
    %850 = vmatpush1.bf16.msra.mxu0 0
    %851 = vmatprep.subr.bf16.mxu0 0
    %852 = vmatpush1.bf16.msra.mxu0 0
    %853 = vmatprep.subr.bf16.mxu0 0
    %854 = vmatpush1.bf16.msra.mxu0 0
    %855 = vmatprep.subr.bf16.mxu0 0
    %856 = vmatpush1.bf16.msra.mxu0 0
    %857 = vmatprep.subr.bf16.mxu0 0
    %858 = vmatpush1.bf16.msra.mxu0 0
    %859 = vmatprep.mubr.bf16.mxu0 0
    %860 = vmatmul.mubr.bf16.gmra.mrb[0].mxu0 %v819
    %v861 = vpop.f32.mrb[0].mxu0
    %v862 = vpop.f32.mrb[0].mxu0
    %v863 = vpop.f32.mrb[0].mxu0
    %v864 = vpop.f32.mrb[0].mxu0
    %865 = vmatprep.mubr.bf16.mxu0 0
    %866 = vmatmul.mubr.bf16.gmra.mrb[0].mxu0 %v822
    %v867 = vpop.f32.mrb[0].mxu0
    %v868 = vpop.f32.mrb[0].mxu0
    %v869 = vpop.f32.mrb[0].mxu0
    %v870 = vpop.f32.mrb[0].mxu0
    %871 = vmatprep.mubr.bf16.mxu0 0
    %872 = vmatmul.mubr.bf16.gmra.mrb[0].mxu0 %v825
    %v873 = vpop.f32.mrb[0].mxu0
    %v874 = vadd.f32 0.0, %v873
    %v875 = vpop.f32.mrb[0].mxu0
    %v876 = vpop.f32.mrb[0].mxu0
    %v877 = vpop.f32.mrb[0].mxu0
    %878 = vdwg.mxu0
    %v883 = vunpack.c.l.b16 %v797
    %v884 = vunpack.c.l.b16 %v798
    %v885 = vunpack.c.l.b16 %v799
    %v886 = vunpack.c.l.b16 %v800
    %v887 = vpack.c.b16 %v884, %v883
    %v888 = vpack.c.b16 %v886, %v885
    %v892 = vsel %vm155, %v792, 0
    %894 = vmatprep.subr.bf16.mxu0 0
    %895 = vmatpush1.bf16.msra.mxu0 %v887
    %896 = vmatprep.subr.bf16.mxu0 0
    %897 = vmatpush1.bf16.msra.mxu0 %v888
    %898 = vmatprep.subr.bf16.mxu0 0
    %899 = vmatpush1.bf16.msra.mxu0 0
    %900 = vmatprep.subr.bf16.mxu0 0
    %901 = vmatpush1.bf16.msra.mxu0 0
    %902 = vmatprep.subr.bf16.mxu0 0
    %903 = vmatpush1.bf16.msra.mxu0 0
    %904 = vmatprep.subr.bf16.mxu0 0
    %905 = vmatpush1.bf16.msra.mxu0 0
    %906 = vmatprep.subr.bf16.mxu0 0
    %907 = vmatpush1.bf16.msra.mxu0 0
    %908 = vmatprep.subr.bf16.mxu0 0
    %909 = vmatpush1.bf16.msra.mxu0 0
    %910 = vmatprep.subr.bf16.mxu0 0
    %911 = vmatpush1.bf16.msra.mxu0 0
    %912 = vmatprep.subr.bf16.mxu0 0
    %913 = vmatpush1.bf16.msra.mxu0 0
    %914 = vmatprep.subr.bf16.mxu0 0
    %915 = vmatpush1.bf16.msra.mxu0 0
    %916 = vmatprep.subr.bf16.mxu0 0
    %917 = vmatpush1.bf16.msra.mxu0 0
    %918 = vmatprep.subr.bf16.mxu0 0
    %919 = vmatpush1.bf16.msra.mxu0 0
    %920 = vmatprep.subr.bf16.mxu0 0
    %921 = vmatpush1.bf16.msra.mxu0 0
    %922 = vmatprep.subr.bf16.mxu0 0
    %923 = vmatpush1.bf16.msra.mxu0 0
    %924 = vmatprep.subr.bf16.mxu0 0
    %925 = vmatpush1.bf16.msra.mxu0 0
    %926 = vmatprep.mubr.bf16.mxu0 0
    %927 = vmatmul.mubr.bf16.gmra.mrb[0].mxu0 %v892
    %v928 = vpop.f32.mrb[0].mxu0
    %v929 = vpop.f32.mrb[0].mxu0
    %v930 = vpop.f32.mrb[0].mxu0
    %v931 = vpop.f32.mrb[0].mxu0
    %932 = vmatprep.mubr.bf16.mxu0 0
    %933 = vmatmul.mubr.bf16.gmra.mrb[0].mxu0 %v819
    %v934 = vpop.f32.mrb[0].mxu0
    %v935 = vpop.f32.mrb[0].mxu0
    %v936 = vpop.f32.mrb[0].mxu0
    %v937 = vpop.f32.mrb[0].mxu0
    %938 = vmatprep.mubr.bf16.mxu0 0
    %939 = vmatmul.mubr.bf16.gmra.mrb[0].mxu0 %v822
    %v940 = vpop.f32.mrb[0].mxu0
    %v941 = vadd.f32 %v874, %v940
    %v942 = vpop.f32.mrb[0].mxu0
    %v943 = vpop.f32.mrb[0].mxu0
    %v944 = vpop.f32.mrb[0].mxu0
    %945 = vdwg.mxu0
    %v946 = vlaneseq
    %v947 = vshrl.u32 %v946, 7
    %v948 = vsub.s32 2, %v947
    %v949 = vrot.slane %v104, %v948
    %v950 = vadd.f32 %v941, %v949
    %v951 = vtanh.pop %v950
    %v952 = vmul.f32 %v950, 0.5
    %v953 = vtanh.pop %v952
    %v954 = vadd.f32 %v953, 1.0
    %v955 = vmul.f32 %v954, 0.5
    %957 = vrot.lane.b32.xlu0 %v955, 96
    %v958 = vpop.permute.xlu0 %957
    %v960 = vmul.f32 %v951, %v958
    %v961 = vpack.c.bf16 %v960, %v960
    %s962 = scalar_lea.vmem %s4, 16
    %v963 = vld [vmem:[%s962] sm:$0xf]
    %v964 = vld [vmem:[%s962 + $0x4] sm:$0xf]
    %v965 = vld [vmem:[%s962 + $0x8] sm:$0xf]
    %v966 = vld [vmem:[%s962 + $0xc] sm:$0xf]
    %v971 = vunpack.c.l.b16 %v963
    %v972 = vunpack.c.l.b16 %v964
    %v973 = vunpack.c.l.b16 %v965
    %v974 = vunpack.c.l.b16 %v966
    %v975 = vpack.c.b16 %v972, %v971
    %v976 = vpack.c.b16 %v974, %v973
    %v980 = vsel %vm155, %v961, 0
    %982 = vmatprep.subr.bf16.mxu0 0
    %983 = vmatpush1.bf16.msra.mxu0 %v975
    %984 = vmatprep.subr.bf16.mxu0 0
    %985 = vmatpush1.bf16.msra.mxu0 %v976
    %986 = vmatprep.subr.bf16.mxu0 0
    %987 = vmatpush1.bf16.msra.mxu0 0
    %988 = vmatprep.subr.bf16.mxu0 0
    %989 = vmatpush1.bf16.msra.mxu0 0
    %990 = vmatprep.subr.bf16.mxu0 0
    %991 = vmatpush1.bf16.msra.mxu0 0
    %992 = vmatprep.subr.bf16.mxu0 0
    %993 = vmatpush1.bf16.msra.mxu0 0
    %994 = vmatprep.subr.bf16.mxu0 0
    %995 = vmatpush1.bf16.msra.mxu0 0
    %996 = vmatprep.subr.bf16.mxu0 0
    %997 = vmatpush1.bf16.msra.mxu0 0
    %998 = vmatprep.subr.bf16.mxu0 0
    %999 = vmatpush1.bf16.msra.mxu0 0
    %1000 = vmatprep.subr.bf16.mxu0 0
    %1001 = vmatpush1.bf16.msra.mxu0 0
    %1002 = vmatprep.subr.bf16.mxu0 0
    %1003 = vmatpush1.bf16.msra.mxu0 0
    %1004 = vmatprep.subr.bf16.mxu0 0
    %1005 = vmatpush1.bf16.msra.mxu0 0
    %1006 = vmatprep.subr.bf16.mxu0 0
    %1007 = vmatpush1.bf16.msra.mxu0 0
    %1008 = vmatprep.subr.bf16.mxu0 0
    %1009 = vmatpush1.bf16.msra.mxu0 0
    %1010 = vmatprep.subr.bf16.mxu0 0
    %1011 = vmatpush1.bf16.msra.mxu0 0
    %1012 = vmatprep.subr.bf16.mxu0 0
    %1013 = vmatpush1.bf16.msra.mxu0 0
    %1014 = vmatprep.mubr.bf16.mxu0 0
    %1015 = vmatmul.mubr.bf16.gmra.mrb[0].mxu0 %v980
    %v1016 = vpop.f32.mrb[0].mxu0
    %v1017 = vadd.f32 0.0, %v1016
    %v1018 = vpop.f32.mrb[0].mxu0
    %v1019 = vpop.f32.mrb[0].mxu0
    %v1020 = vpop.f32.mrb[0].mxu0
    %1021 = vdwg.mxu0
    %v1022 = vadd.f32 %v574, %v1017
    %v1023 = vlaneseq
    %v1024 = vshrl.u32 %v1023, 7
    %v1025 = vsub.s32 4, %v1024
    %v1026 = vrot.slane %v104, %v1025
    %v1027 = vadd.f32 %v1022, %v1026
    %v1028 = vmax.f32 %v1027, 0.0
    %v1029 = vpack.c.bf16 %v1028, %v1028
    %v1030 = vld [vmem:[#allocation7] sm:$0xf]
    %v1031 = vld [vmem:[#allocation7 + $0x4] sm:$0xf]
    %v1032 = vld [vmem:[#allocation7 + $0x8] sm:$0xf]
    %v1033 = vld [vmem:[#allocation7 + $0xc] sm:$0xf]
    %v1034 = vlaneseq
    %v1035 = vshrl.u32 %v1034, 7
    %v1036 = vsub.s32 7, %v1035
    %v1037 = vrot.slane %v104, %v1036
    %v1042 = vunpack.c.l.b16 %v1030
    %v1043 = vunpack.c.l.b16 %v1031
    %v1044 = vunpack.c.l.b16 %v1032
    %v1045 = vunpack.c.l.b16 %v1033
    %v1046 = vpack.c.b16 %v1043, %v1042
    %v1047 = vpack.c.b16 %v1045, %v1044
    %v1051 = vsel %vm155, %v1029, 0
    %1053 = vmatprep.subr.bf16.mxu0 0
    %1054 = vmatpush1.bf16.msra.mxu0 %v1046
    %1055 = vmatprep.subr.bf16.mxu0 0
    %1056 = vmatpush1.bf16.msra.mxu0 %v1047
    %1057 = vmatprep.subr.bf16.mxu0 0
    %1058 = vmatpush1.bf16.msra.mxu0 0
    %1059 = vmatprep.subr.bf16.mxu0 0
    %1060 = vmatpush1.bf16.msra.mxu0 0
    %1061 = vmatprep.subr.bf16.mxu0 0
    %1062 = vmatpush1.bf16.msra.mxu0 0
    %1063 = vmatprep.subr.bf16.mxu0 0
    %1064 = vmatpush1.bf16.msra.mxu0 0
    %1065 = vmatprep.subr.bf16.mxu0 0
    %1066 = vmatpush1.bf16.msra.mxu0 0
    %1067 = vmatprep.subr.bf16.mxu0 0
    %1068 = vmatpush1.bf16.msra.mxu0 0
    %1069 = vmatprep.subr.bf16.mxu0 0
    %1070 = vmatpush1.bf16.msra.mxu0 0
    %1071 = vmatprep.subr.bf16.mxu0 0
    %1072 = vmatpush1.bf16.msra.mxu0 0
    %1073 = vmatprep.subr.bf16.mxu0 0
    %1074 = vmatpush1.bf16.msra.mxu0 0
    %1075 = vmatprep.subr.bf16.mxu0 0
    %1076 = vmatpush1.bf16.msra.mxu0 0
    %1077 = vmatprep.subr.bf16.mxu0 0
    %1078 = vmatpush1.bf16.msra.mxu0 0
    %1079 = vmatprep.subr.bf16.mxu0 0
    %1080 = vmatpush1.bf16.msra.mxu0 0
    %1081 = vmatprep.subr.bf16.mxu0 0
    %1082 = vmatpush1.bf16.msra.mxu0 0
    %1083 = vmatprep.subr.bf16.mxu0 0
    %1084 = vmatpush1.bf16.msra.mxu0 0
    %1085 = vmatprep.mubr.bf16.mxu0 0
    %1086 = vmatmul.mubr.bf16.gmra.mrb[0].mxu0 %v1051
    %v1087 = vpop.f32.mrb[0].mxu0
    %v1088 = vadd.f32 %v1037, %v1087
    %v1089 = vpop.f32.mrb[0].mxu0
    %v1090 = vpop.f32.mrb[0].mxu0
    %v1091 = vpop.f32.mrb[0].mxu0
    %1092 = vdwg.mxu0
    %v1093 = vmax.f32 %v1088, 0.0
    %v1094 = vpack.c.bf16 %v1093, %v1093
    %v1095 = vld [vmem:[%s7] sm:$0xff]
    %v1096 = vld [vmem:[%s7 + $0x8] sm:$0xff]
    %v1097 = vld [vmem:[%s7 + $0x10] sm:$0xff]
    %v1098 = vld [vmem:[%s7 + $0x18] sm:$0xff]
    %v1099 = vlaneseq
    %v1100 = vshrl.u32 %v1099, 7
    %v1101 = vsub.s32 0, %v1100
    %v1102 = vrot.slane %v105, %v1101
    %v1103 = vlaneseq
    %v1104 = vshrl.u32 %v1103, 7
    %v1105 = vsub.s32 0, %v1104
    %v1106 = vrot.slane %v106, %v1105
    %v1111 = vunpack.c.l.b16 %v1095
    %v1112 = vunpack.c.h.b16 %v1095
    %v1113 = vunpack.c.l.b16 %v1096
    %v1114 = vunpack.c.h.b16 %v1096
    %v1115 = vunpack.c.l.b16 %v1097
    %v1116 = vunpack.c.h.b16 %v1097
    %v1117 = vunpack.c.l.b16 %v1098
    %v1118 = vunpack.c.h.b16 %v1098
    %v1119 = vpack.c.b16 %v1113, %v1111
    %v1120 = vpack.c.b16 %v1114, %v1112
    %v1121 = vpack.c.b16 %v1117, %v1115
    %v1122 = vpack.c.b16 %v1118, %v1116
    %v1128 = vsel %vm155, %v1094, 0
    %1130 = vmatprep.subr.bf16.mxu0 %v1120
    %1131 = vmatpush1.bf16.msra.mxu0 %v1119
    %1132 = vmatprep.subr.bf16.mxu0 %v1122
    %1133 = vmatpush1.bf16.msra.mxu0 %v1121
    %1134 = vmatprep.subr.bf16.mxu0 0
    %1135 = vmatpush1.bf16.msra.mxu0 0
    %1136 = vmatprep.subr.bf16.mxu0 0
    %1137 = vmatpush1.bf16.msra.mxu0 0
    %1138 = vmatprep.subr.bf16.mxu0 0
    %1139 = vmatpush1.bf16.msra.mxu0 0
    %1140 = vmatprep.subr.bf16.mxu0 0
    %1141 = vmatpush1.bf16.msra.mxu0 0
    %1142 = vmatprep.subr.bf16.mxu0 0
    %1143 = vmatpush1.bf16.msra.mxu0 0
    %1144 = vmatprep.subr.bf16.mxu0 0
    %1145 = vmatpush1.bf16.msra.mxu0 0
    %1146 = vmatprep.subr.bf16.mxu0 0
    %1147 = vmatpush1.bf16.msra.mxu0 0
    %1148 = vmatprep.subr.bf16.mxu0 0
    %1149 = vmatpush1.bf16.msra.mxu0 0
    %1150 = vmatprep.subr.bf16.mxu0 0
    %1151 = vmatpush1.bf16.msra.mxu0 0
    %1152 = vmatprep.subr.bf16.mxu0 0
    %1153 = vmatpush1.bf16.msra.mxu0 0
    %1154 = vmatprep.subr.bf16.mxu0 0
    %1155 = vmatpush1.bf16.msra.mxu0 0
    %1156 = vmatprep.subr.bf16.mxu0 0
    %1157 = vmatpush1.bf16.msra.mxu0 0
    %1158 = vmatprep.subr.bf16.mxu0 0
    %1159 = vmatpush1.bf16.msra.mxu0 0
    %1160 = vmatprep.subr.bf16.mxu0 0
    %1161 = vmatpush1.bf16.msra.mxu0 0
    %1162 = vmatprep.mubr.bf16.mxu0 0
    %1163 = vmatmul.mubr.bf16.gmra.mrb[0].mxu0 %v1128
    %v1164 = vpop.f32.mrb[0].mxu0
    %v1165 = vadd.f32 %v1102, %v1164
    %v1166 = vpop.f32.mrb[0].mxu0
    %v1167 = vadd.f32 %v1106, %v1166
    %v1168 = vpop.f32.mrb[0].mxu0
    %v1169 = vpop.f32.mrb[0].mxu0
    %1170 = vdwg.mxu0
    %1172 = vrot.lane.b32.xlu0 %v1165, 96
    %v1173 = vpop.permute.xlu0 %1172
    %v1175 = vmax.f32 %v1165, %v1173
    %1176 = vrot.lane.b32.xlu0 %v1165, 64
    %v1177 = vpop.permute.xlu0 %1176
    %v1179 = vmax.f32 %v1175, %v1177
    %1180 = vrot.lane.b32.xlu0 %v1165, 32
    %v1181 = vpop.permute.xlu0 %1180
    %v1183 = vmax.f32 %v1179, %v1181
    %v1184 = vsel %vm155, %v1181, 0.0
    %1185 = vadd.xlane.f32.xlu0 %v1184
    %v1186 = vpop.xlane.xlu0 %1185
    %v1187 = vsel %vm155, %v1167, 0.0
    %1188 = vadd.xlane.f32.xlu0 %v1187
    %v1189 = vpop.xlane.xlu0 %1188
    %v1190 = vadd.f32 %v1186, %v1189
    %v1191 = vsel %vm155, %v1183, 0.0
    %1192 = vadd.xlane.f32.xlu0 %v1191
    %v1193 = vpop.xlane.xlu0 %1192
    %v1194 = vadd.f32 %v1190, %v1193
    %v1195 = vmul.f32 %v1194, 0.010416667
    %v1196 = vsub.f32 %v1165, %v1195
    %v1197 = vmul.f32 %v1196, %v1196
    %1199 = vrot.lane.b32.xlu0 %v1197, 32
    %v1200 = vpop.permute.xlu0 %1199
    %v1202 = vsel %vm155, %v1200, 0.0
    %1203 = vadd.xlane.f32.xlu0 %v1202
    %v1204 = vpop.xlane.xlu0 %1203
    %v1205 = vsub.f32 %v1167, %v1195
    %v1206 = vmul.f32 %v1205, %v1205
    %v1207 = vsel %vm155, %v1206, 0.0
    %1208 = vadd.xlane.f32.xlu0 %v1207
    %v1209 = vpop.xlane.xlu0 %1208
    %v1210 = vadd.f32 %v1204, %v1209
    %v1211 = vsub.f32 %v1183, %v1195
    %v1212 = vmul.f32 %v1211, %v1211
    %v1213 = vsel %vm155, %v1212, 0.0
    %1214 = vadd.xlane.f32.xlu0 %v1213
    %v1215 = vpop.xlane.xlu0 %1214
    %v1216 = vadd.f32 %v1210, %v1215
    %v1217 = vmul.f32 %v1216, 0.010416667
    %v1218 = vadd.f32 %v1217, 1e-05
    %v1219 = vrsqrt.pop %v1218
    %v1220 = vmul.f32 %v1196, %v1219
    %v1221 = vlaneseq
    %v1222 = vshrl.u32 %v1221, 7
    %v1223 = vsub.s32 1, %v1222
    %v1224 = vrot.slane %v105, %v1223
    %1226 = vrot.lane.b32.xlu0 %v1224, 96
    %v1227 = vpop.permute.xlu0 %1226
    %v1229 = vmul.f32 %v1220, %v1227
    %v1230 = vlaneseq
    %v1231 = vshrl.u32 %v1230, 7
    %v1232 = vsub.s32 2, %v1231
    %v1233 = vrot.slane %v105, %v1232
    %1235 = vrot.lane.b32.xlu0 %v1233, 96
    %v1236 = vpop.permute.xlu0 %1235
    %v1238 = vadd.f32 %v1229, %v1236
    %v1239 = vmul.f32 %v1205, %v1219
    %v1240 = vmul.f32 %v1239, %v1227
    %v1241 = vadd.f32 %v1240, %v1236
    %v1242 = vmul.f32 %v1211, %v1219
    %1243 = vrot.lane.b32.xlu0 %v1224, 64
    %v1244 = vpop.permute.xlu0 %1243
    %v1246 = vmul.f32 %v1242, %v1244
    %1247 = vrot.lane.b32.xlu0 %v1233, 64
    %v1248 = vpop.permute.xlu0 %1247
    %v1250 = vadd.f32 %v1246, %v1248
    %v1251 = vpack.c.bf16 %v1238, %v1238
    %v1252 = vld [vmem:[%s8] sm:$0xf]
    %v1253 = vld [vmem:[%s8 + $0x4] sm:$0xf]
    %v1254 = vld [vmem:[%s8 + $0x8] sm:$0xf]
    %v1255 = vld [vmem:[%s8 + $0xc] sm:$0xf]
    %v1256 = vpack.c.bf16 %v1241, %v1241
    %s1257 = scalar_lea.vmem %s8, 16
    %v1258 = vld [vmem:[%s1257] sm:$0xf]
    %v1259 = vld [vmem:[%s1257 + $0x4] sm:$0xf]
    %v1260 = vld [vmem:[%s1257 + $0x8] sm:$0xf]
    %v1261 = vld [vmem:[%s1257 + $0xc] sm:$0xf]
    %v1266 = vunpack.c.l.b16 %v1258
    %v1267 = vunpack.c.l.b16 %v1259
    %v1268 = vunpack.c.l.b16 %v1260
    %v1269 = vunpack.c.l.b16 %v1261
    %v1270 = vpack.c.b16 %v1267, %v1266
    %v1271 = vpack.c.b16 %v1269, %v1268
    %v1275 = vsel %vm155, %v1256, 0
    %1277 = vmatprep.subr.bf16.mxu0 0
    %1278 = vmatpush1.bf16.msra.mxu0 %v1270
    %1279 = vmatprep.subr.bf16.mxu0 0
    %1280 = vmatpush1.bf16.msra.mxu0 %v1271
    %1281 = vmatprep.subr.bf16.mxu0 0
    %1282 = vmatpush1.bf16.msra.mxu0 0
    %1283 = vmatprep.subr.bf16.mxu0 0
    %1284 = vmatpush1.bf16.msra.mxu0 0
    %1285 = vmatprep.subr.bf16.mxu0 0
    %1286 = vmatpush1.bf16.msra.mxu0 0
    %1287 = vmatprep.subr.bf16.mxu0 0
    %1288 = vmatpush1.bf16.msra.mxu0 0
    %1289 = vmatprep.subr.bf16.mxu0 0
    %1290 = vmatpush1.bf16.msra.mxu0 0
    %1291 = vmatprep.subr.bf16.mxu0 0
    %1292 = vmatpush1.bf16.msra.mxu0 0
    %1293 = vmatprep.subr.bf16.mxu0 0
    %1294 = vmatpush1.bf16.msra.mxu0 0
    %1295 = vmatprep.subr.bf16.mxu0 0
    %1296 = vmatpush1.bf16.msra.mxu0 0
    %1297 = vmatprep.subr.bf16.mxu0 0
    %1298 = vmatpush1.bf16.msra.mxu0 0
    %1299 = vmatprep.subr.bf16.mxu0 0
    %1300 = vmatpush1.bf16.msra.mxu0 0
    %1301 = vmatprep.subr.bf16.mxu0 0
    %1302 = vmatpush1.bf16.msra.mxu0 0
    %1303 = vmatprep.subr.bf16.mxu0 0
    %1304 = vmatpush1.bf16.msra.mxu0 0
    %1305 = vmatprep.subr.bf16.mxu0 0
    %1306 = vmatpush1.bf16.msra.mxu0 0
    %1307 = vmatprep.subr.bf16.mxu0 0
    %1308 = vmatpush1.bf16.msra.mxu0 0
    %1309 = vmatprep.mubr.bf16.mxu0 0
    %1310 = vmatmul.mubr.bf16.gmra.mrb[0].mxu0 %v1275
    %v1311 = vpop.f32.mrb[0].mxu0
    %v1312 = vadd.f32 0.0, %v1311
    %v1313 = vpop.f32.mrb[0].mxu0
    %v1314 = vpop.f32.mrb[0].mxu0
    %v1315 = vpop.f32.mrb[0].mxu0
    %1316 = vdwg.mxu0
    %1318 = vrot.lane.b32.xlu0 %v1251, 32
    %v1319 = vpop.permute.xlu0 %1318
    %v1324 = vunpack.c.l.b16 %v1252
    %v1325 = vunpack.c.l.b16 %v1253
    %v1326 = vunpack.c.l.b16 %v1254
    %v1327 = vunpack.c.l.b16 %v1255
    %v1328 = vpack.c.b16 %v1325, %v1324
    %v1329 = vpack.c.b16 %v1327, %v1326
    %v1333 = vsel %vm155, %v1319, 0
    %1335 = vmatprep.subr.bf16.mxu0 0
    %1336 = vmatpush1.bf16.msra.mxu0 %v1328
    %1337 = vmatprep.subr.bf16.mxu0 0
    %1338 = vmatpush1.bf16.msra.mxu0 %v1329
    %1339 = vmatprep.subr.bf16.mxu0 0
    %1340 = vmatpush1.bf16.msra.mxu0 0
    %1341 = vmatprep.subr.bf16.mxu0 0
    %1342 = vmatpush1.bf16.msra.mxu0 0
    %1343 = vmatprep.subr.bf16.mxu0 0
    %1344 = vmatpush1.bf16.msra.mxu0 0
    %1345 = vmatprep.subr.bf16.mxu0 0
    %1346 = vmatpush1.bf16.msra.mxu0 0
    %1347 = vmatprep.subr.bf16.mxu0 0
    %1348 = vmatpush1.bf16.msra.mxu0 0
    %1349 = vmatprep.subr.bf16.mxu0 0
    %1350 = vmatpush1.bf16.msra.mxu0 0
    %1351 = vmatprep.subr.bf16.mxu0 0
    %1352 = vmatpush1.bf16.msra.mxu0 0
    %1353 = vmatprep.subr.bf16.mxu0 0
    %1354 = vmatpush1.bf16.msra.mxu0 0
    %1355 = vmatprep.subr.bf16.mxu0 0
    %1356 = vmatpush1.bf16.msra.mxu0 0
    %1357 = vmatprep.subr.bf16.mxu0 0
    %1358 = vmatpush1.bf16.msra.mxu0 0
    %1359 = vmatprep.subr.bf16.mxu0 0
    %1360 = vmatpush1.bf16.msra.mxu0 0
    %1361 = vmatprep.subr.bf16.mxu0 0
    %1362 = vmatpush1.bf16.msra.mxu0 0
    %1363 = vmatprep.subr.bf16.mxu0 0
    %1364 = vmatpush1.bf16.msra.mxu0 0
    %1365 = vmatprep.subr.bf16.mxu0 0
    %1366 = vmatpush1.bf16.msra.mxu0 0
    %1367 = vmatprep.mubr.bf16.mxu0 0
    %1368 = vmatmul.mubr.bf16.gmra.mrb[0].mxu0 %v1333
    %v1369 = vpop.f32.mrb[0].mxu0
    %v1370 = vadd.f32 %v1312, %v1369
    %v1371 = vpop.f32.mrb[0].mxu0
    %v1372 = vpop.f32.mrb[0].mxu0
    %v1373 = vpop.f32.mrb[0].mxu0
    %1374 = vdwg.mxu0
    %v1375 = vpack.c.bf16 %v1250, %v1250
    %s1376 = scalar_lea.vmem %s8, 32
    %v1377 = vld [vmem:[%s1376] sm:$0xf]
    %v1378 = vld [vmem:[%s1376 + $0x4] sm:$0xf]
    %v1379 = vld [vmem:[%s1376 + $0x8] sm:$0xf]
    %v1380 = vld [vmem:[%s1376 + $0xc] sm:$0xf]
    %v1385 = vunpack.c.l.b16 %v1377
    %v1386 = vunpack.c.l.b16 %v1378
    %v1387 = vunpack.c.l.b16 %v1379
    %v1388 = vunpack.c.l.b16 %v1380
    %v1389 = vpack.c.b16 %v1386, %v1385
    %v1390 = vpack.c.b16 %v1388, %v1387
    %v1394 = vsel %vm155, %v1375, 0
    %1396 = vmatprep.subr.bf16.mxu0 0
    %1397 = vmatpush1.bf16.msra.mxu0 %v1389
    %1398 = vmatprep.subr.bf16.mxu0 0
    %1399 = vmatpush1.bf16.msra.mxu0 %v1390
    %1400 = vmatprep.subr.bf16.mxu0 0
    %1401 = vmatpush1.bf16.msra.mxu0 0
    %1402 = vmatprep.subr.bf16.mxu0 0
    %1403 = vmatpush1.bf16.msra.mxu0 0
    %1404 = vmatprep.subr.bf16.mxu0 0
    %1405 = vmatpush1.bf16.msra.mxu0 0
    %1406 = vmatprep.subr.bf16.mxu0 0
    %1407 = vmatpush1.bf16.msra.mxu0 0
    %1408 = vmatprep.subr.bf16.mxu0 0
    %1409 = vmatpush1.bf16.msra.mxu0 0
    %1410 = vmatprep.subr.bf16.mxu0 0
    %1411 = vmatpush1.bf16.msra.mxu0 0
    %1412 = vmatprep.subr.bf16.mxu0 0
    %1413 = vmatpush1.bf16.msra.mxu0 0
    %1414 = vmatprep.subr.bf16.mxu0 0
    %1415 = vmatpush1.bf16.msra.mxu0 0
    %1416 = vmatprep.subr.bf16.mxu0 0
    %1417 = vmatpush1.bf16.msra.mxu0 0
    %1418 = vmatprep.subr.bf16.mxu0 0
    %1419 = vmatpush1.bf16.msra.mxu0 0
    %1420 = vmatprep.subr.bf16.mxu0 0
    %1421 = vmatpush1.bf16.msra.mxu0 0
    %1422 = vmatprep.subr.bf16.mxu0 0
    %1423 = vmatpush1.bf16.msra.mxu0 0
    %1424 = vmatprep.subr.bf16.mxu0 0
    %1425 = vmatpush1.bf16.msra.mxu0 0
    %1426 = vmatprep.subr.bf16.mxu0 0
    %1427 = vmatpush1.bf16.msra.mxu0 0
    %1428 = vmatprep.mubr.bf16.mxu0 0
    %1429 = vmatmul.mubr.bf16.gmra.mrb[0].mxu0 %v1394
    %v1430 = vpop.f32.mrb[0].mxu0
    %v1431 = vadd.f32 0.0, %v1430
    %v1432 = vpop.f32.mrb[0].mxu0
    %v1433 = vpop.f32.mrb[0].mxu0
    %v1434 = vpop.f32.mrb[0].mxu0
    %1435 = vdwg.mxu0
    %v1436 = vadd.f32 %v1370, %v1431
    %v1437 = vlaneseq
    %v1438 = vshrl.u32 %v1437, 7
    %v1439 = vsub.s32 3, %v1438
    %v1440 = vrot.slane %v105, %v1439
    %v1441 = vadd.f32 %v1436, %v1440
    %vm1442 = vcmask 31744
    %1443 = vst.msk [vmem:[%s10] sm:$0xff] %vm1442, %v1441
    // Predicated region
    $region62: #{tpu_custom_call.1} parent=1 // pred_check
      _
    $region63: #{tpu_custom_call.1} parent=1 // pred_check_branch
      %1445 = sbr.rel (0) target = $region65
    $region64: #{tpu_custom_call.1} parent=1 // pred_region
      _
    $region65: #{tpu_custom_call.1} parent=1 // pred_fallthru
      _
    // Predicated region
    $region66: #{tpu_custom_call.1} parent=1 // pred_check
      _
    $region67: #{tpu_custom_call.1} parent=1 // pred_check_branch
      %1447 = sbr.rel (0) target = $region69
    $region68: #{tpu_custom_call.1} parent=1 // pred_region
      _
    $region69: #{tpu_custom_call.1} parent=1 // pred_fallthru
      _
    %1448 = vsyncpa [#allocation3], 1
    %1449 = vsyncpa [#allocation5], 1
    %1450 = vsyncpa [#allocation8], 1

</llo_original>
